<compile_context>
chip_gen: v7x
topology: tpu7x:2x2x1
jax: 0.10.0
libtpu: 0.0.40
codegen_flags: <defaults>
</compile_context>

<pallas_src>
import math

import jax
import jax.numpy as jnp
from jax.experimental import pallas as pl
from jax.experimental.pallas import tpu as pltpu

H1 = 400                  # true first hidden width (8-aligned, full-dim block)
H2_TRUE, H2 = 300, 384    # second hidden padded to a lane multiple (zeros thru ReLU)
IN_PAD = 128              # state(64) + action(8) = 72 -> one lane-dense 128 input
OUT = 8                   # 1-wide q padded to 8 (full-dim block, tiny writeback)


def _branch_mlp(x, w1, b1, w2, b2, w3, b3):
    """Fused Linear->ReLU->Linear->ReLU->Linear, bf16 MXU inputs, f32 accum."""
    h = jnp.dot(x, w1, preferred_element_type=jnp.float32) + b1
    h = jnp.maximum(h, 0.0).astype(jnp.bfloat16)
    h = jnp.dot(h, w2, preferred_element_type=jnp.float32) + b2
    h = jnp.maximum(h, 0.0).astype(jnp.bfloat16)
    return jnp.dot(h, w3, preferred_element_type=jnp.float32) + b3


def _critic_branch_kernel(x_ref, w1_ref, b1_ref, w2_ref, b2_ref, w3_ref, b3_ref,
                          q_ref):
    """One Q branch (grid axis 0) on one batch tile (grid axis 1) — v7x layout."""
    q_ref[...] = _branch_mlp(x_ref[...], w1_ref[...], b1_ref[...],
                             w2_ref[...], b2_ref[...], w3_ref[...], b3_ref[...])


def _critic_fused_kernel(x_ref, w1_ref, b1_ref, w2_ref, b2_ref, w3_ref, b3_ref,
                         q_ref):
    """Both Q branches unrolled in one body — single-TensorCore (v5e/v6e) layout."""
    x = x_ref[...]
    for br in range(2):
        q_ref[br] = _branch_mlp(x, w1_ref[br], b1_ref[br], w2_ref[br],
                                b2_ref[br], w3_ref[br], b3_ref[br])


def _init_linear(key, fan_in, fan_out):
    """PyTorch nn.Linear default init: U(-1/sqrt(fan_in), 1/sqrt(fan_in))."""
    kw, kb = jax.random.split(key)
    bound = 1.0 / math.sqrt(fan_in)
    w = jax.random.uniform(kw, (fan_in, fan_out), jnp.float32, -bound, bound)
    b = jax.random.uniform(kb, (1, fan_out), jnp.float32, -bound, bound)
    return w, b


def init_critic_params(key, state_dim, action_dim):
    """Returns (padded/stacked/bf16 kernel params, per-branch unpadded f32 params)."""
    s_flat = state_dim[0] * state_dim[1]
    in_dim = s_flat + action_dim
    dims = [(in_dim, H1), (H1, H2_TRUE), (H2_TRUE, 1)]
    keys = jax.random.split(key, 6)

    ref_params = []
    w1s, b1s, w2s, b2s, w3s, b3s = [], [], [], [], [], []
    for branch in range(2):
        layer_p = []
        for li, (fi, fo) in enumerate(dims):
            w, b = _init_linear(keys[branch * 3 + li], fi, fo)
            layer_p.extend([w, b])
        ref_params.append(tuple(layer_p))
        w1, b1, w2, b2, w3, b3 = layer_p
        # bf16 weights (f32 accumulation in the kernel), f32 biases.
        # All padded rows/lanes are exactly zero -> identical results thru ReLU.
        w1s.append(jnp.pad(w1, ((0, IN_PAD - in_dim), (0, 0))).astype(jnp.bfloat16))
        b1s.append(b1)
        w2s.append(jnp.pad(w2, ((0, 0), (0, H2 - H2_TRUE))).astype(jnp.bfloat16))
        b2s.append(jnp.pad(b2, ((0, 0), (0, H2 - H2_TRUE))))
        w3s.append(jnp.pad(w3, ((0, H2 - H2_TRUE), (0, OUT - 1))).astype(jnp.bfloat16))
        b3s.append(jnp.pad(b3, ((0, 0), (0, OUT - 1))))

    pad_params = tuple(jnp.stack(p) for p in (w1s, b1s, w2s, b2s, w3s, b3s))
    return pad_params, ref_params


def _round_up(n, m):
    return ((n + m - 1) // m) * m


def _has_two_tensorcores():
    # v7x (and v4/v5p megacore) have 2 TensorCores/chip -> one Q branch per core.
    try:
        kind = jax.devices()[0].device_kind.lower()
    except Exception:  # pragma: no cover
        return False
    return ("v7" in kind) or ("v5p" in kind) or (" v4" in kind)


def critic_forward(state, action, pad_params, state_dim, action_dim,
                   block_m=512, use_branch_grid=None):
    if use_branch_grid is None:
        use_branch_grid = _has_two_tensorcores()

    s_flat = state_dim[0] * state_dim[1]
    B = state.shape[0]
    # hstack(state, action) fused in the wrapper (only B*128*2 bytes) so the
    # kernel sees a single lane-dense (tm, 128) bf16 input.
    x = jnp.concatenate(
        [state.reshape(B, s_flat), action.reshape(B, action_dim)], axis=1
    ).astype(jnp.float32)

    # Batch tiling: one 16-aligned tile for small batches; for larger batches
    # split into the fewest block_m-sized tiles with balanced tile size
    # (avoids near-2x padding for ragged B slightly above block_m).
    if B <= block_m:
        tm, num_m = _round_up(B, 16), 1
    else:
        num_m = pl.cdiv(B, block_m)
        tm = _round_up(pl.cdiv(B, num_m), 16)
    b_pad = tm * num_m
    x = jnp.pad(x, ((0, b_pad - B), (0, IN_PAD - x.shape[1]))).astype(jnp.bfloat16)

    w1, b1, w2, b2, w3, b3 = pad_params

    flops = 2 * b_pad * 2 * (IN_PAD * H1 + H1 * H2 + H2 * OUT)
    # Weights counted ONCE (resident across the batch-tile axis), not per tile.
    bytes_acc = int(sum(int(p.size) * p.dtype.itemsize for p in pad_params)
                    + int(x.size) * 2 + 2 * b_pad * OUT * 4)
    cost = pl.CostEstimate(flops=flops, transcendentals=0, bytes_accessed=bytes_acc)

    if use_branch_grid:
        # Leading parallel branch axis -> megacore shards one Q branch per core.
        def w_spec(shape):
            return pl.BlockSpec((None,) + shape, lambda br, m: (br, 0, 0))

        grid_spec = pltpu.PrefetchScalarGridSpec(
            num_scalar_prefetch=0,
            grid=(2, num_m),
            in_specs=[
                pl.BlockSpec((tm, IN_PAD), lambda br, m: (m, 0)),
                w_spec((IN_PAD, H1)), w_spec((1, H1)),
                w_spec((H1, H2)), w_spec((1, H2)),
                w_spec((H2, OUT)), w_spec((1, OUT)),
            ],
            out_specs=pl.BlockSpec((None, tm, OUT), lambda br, m: (br, m, 0)),
        )
        kernel = _critic_branch_kernel
        dim_sem = ("parallel", "parallel")
    else:
        # Single TensorCore: both branches fused into one grid step per tile.
        def w_spec(shape):
            return pl.BlockSpec((2,) + shape, lambda m: (0, 0, 0))

        grid_spec = pltpu.PrefetchScalarGridSpec(
            num_scalar_prefetch=0,
            grid=(num_m,),
            in_specs=[
                pl.BlockSpec((tm, IN_PAD), lambda m: (m, 0)),
                w_spec((IN_PAD, H1)), w_spec((1, H1)),
                w_spec((H1, H2)), w_spec((1, H2)),
                w_spec((H2, OUT)), w_spec((1, OUT)),
            ],
            out_specs=pl.BlockSpec((2, tm, OUT), lambda m: (0, m, 0)),
        )
        kernel = _critic_fused_kernel
        dim_sem = ("parallel",)

    out = pl.pallas_call(
        kernel,
        out_shape=jax.ShapeDtypeStruct((2, b_pad, OUT), jnp.float32),
        grid_spec=grid_spec,
        compiler_params=pltpu.CompilerParams(dimension_semantics=dim_sem),
        cost_estimate=cost,
    )(x, w1, b1, w2, b2, w3, b3)

    q1 = out[0, :B, 0:1]
    q2 = out[1, :B, 0:1]
    return q1, q2


if __name__ == "__main__":
    # Small shapes consistent with the module: state_dim=(4,16), action_dim=8, batch=2.
    state_dim = (4, 16)
    action_dim = 8
    batch = 2

    key = jax.random.PRNGKey(0)
    k_params, k_state, k_action = jax.random.split(key, 3)

    pad_params, ref_params = init_critic_params(k_params, state_dim, action_dim)
    state = jax.random.normal(k_state, (batch, state_dim[0], state_dim[1]), jnp.float32)
    action = jax.random.normal(k_action, (batch, action_dim), jnp.float32)

    # Pure-JAX reference using the same bf16-rounded weights/input the kernel sees.
    x_ref = jnp.concatenate(
        [state.reshape(batch, -1), action.reshape(batch, -1)], axis=1)
    x_ref_bf = x_ref.astype(jnp.bfloat16).astype(jnp.float32)

    def ref_mlp(x, p):
        w1, b1, w2, b2, w3, b3 = p
        bf = lambda w: w.astype(jnp.bfloat16).astype(jnp.float32)
        h = jnp.maximum(x @ bf(w1) + b1, 0.0)
        h = jnp.maximum(h @ bf(w2) + b2, 0.0)
        return h @ bf(w3) + b3

    q1_ref = ref_mlp(x_ref_bf, ref_params[0])
    q2_ref = ref_mlp(x_ref_bf, ref_params[1])

    # Exercise both layouts (v7x branch-parallel grid and v5e/v6e fused body).
    for use_branch_grid in (True, False):
        q1, q2 = critic_forward(state, action, pad_params, state_dim, action_dim,
                                use_branch_grid=use_branch_grid)
        jax.block_until_ready((q1, q2))
        assert q1.shape == (batch, 1) and q2.shape == (batch, 1)
        assert jnp.allclose(q1, q1_ref, atol=2e-2, rtol=2e-2), "q1 mismatch"
        assert jnp.allclose(q2, q2_ref, atol=2e-2, rtol=2e-2), "q2 mismatch"

    print("KERNEL_OK")
</pallas_src>

<mosaic_0001>
module attributes {stable_mosaic.version = 11 : i64} {
  func.func @_critic_branch_kernel(%arg0: i32, %arg1: i32, %arg2: memref<16x128xbf16, #tpu.memory_space<vmem>>, %arg3: memref<1x128x400xbf16, #tpu.memory_space<vmem>>, %arg4: memref<1x1x400xf32, #tpu.memory_space<vmem>>, %arg5: memref<1x400x384xbf16, #tpu.memory_space<vmem>>, %arg6: memref<1x1x384xf32, #tpu.memory_space<vmem>>, %arg7: memref<1x384x8xbf16, #tpu.memory_space<vmem>>, %arg8: memref<1x1x8xf32, #tpu.memory_space<vmem>>, %arg9: memref<1x16x8xf32, #tpu.memory_space<vmem>>) attributes {dimension_semantics = [#tpu.dimension_semantics<parallel>, #tpu.dimension_semantics<parallel>], iteration_bounds = array<i64: 2, 1>, scalar_prefetch = 0 : i64, scratch_operands = 0 : i64, tpu.core_type = #tpu.core_type<tc>, window_params = [{transform_indices = @transform_0, window_bounds = array<i64: 16, 128>}, {transform_indices = @transform_1, window_bounds = array<i64: 1, 128, 400>}, {transform_indices = @transform_2, window_bounds = array<i64: 1, 1, 400>}, {transform_indices = @transform_3, window_bounds = array<i64: 1, 400, 384>}, {transform_indices = @transform_4, window_bounds = array<i64: 1, 1, 384>}, {transform_indices = @transform_5, window_bounds = array<i64: 1, 384, 8>}, {transform_indices = @transform_6, window_bounds = array<i64: 1, 1, 8>}, {transform_indices = @transform_7, window_bounds = array<i64: 1, 16, 8>}]} {
    %c0 = arith.constant 0 : index
    %c0_0 = arith.constant 0 : index
    %0 = vector.load %arg2[%c0, %c0_0] : memref<16x128xbf16, #tpu.memory_space<vmem>>, vector<16x128xbf16>
    %c0_1 = arith.constant 0 : index
    %c0_2 = arith.constant 0 : index
    %c0_3 = arith.constant 0 : index
    %1 = vector.load %arg3[%c0_1, %c0_2, %c0_3] : memref<1x128x400xbf16, #tpu.memory_space<vmem>>, vector<1x128x400xbf16>
    %2 = vector.shape_cast %1 : vector<1x128x400xbf16> to vector<128x400xbf16>
    %c0_4 = arith.constant 0 : index
    %c0_5 = arith.constant 0 : index
    %c0_6 = arith.constant 0 : index
    %3 = vector.load %arg4[%c0_4, %c0_5, %c0_6] : memref<1x1x400xf32, #tpu.memory_space<vmem>>, vector<1x1x400xf32>
    %4 = vector.shape_cast %3 : vector<1x1x400xf32> to vector<1x400xf32>
    %c0_7 = arith.constant 0 : index
    %c0_8 = arith.constant 0 : index
    %c0_9 = arith.constant 0 : index
    %5 = vector.load %arg5[%c0_7, %c0_8, %c0_9] : memref<1x400x384xbf16, #tpu.memory_space<vmem>>, vector<1x400x384xbf16>
    %6 = vector.shape_cast %5 : vector<1x400x384xbf16> to vector<400x384xbf16>
    %c0_10 = arith.constant 0 : index
    %c0_11 = arith.constant 0 : index
    %c0_12 = arith.constant 0 : index
    %7 = vector.load %arg6[%c0_10, %c0_11, %c0_12] : memref<1x1x384xf32, #tpu.memory_space<vmem>>, vector<1x1x384xf32>
    %8 = vector.shape_cast %7 : vector<1x1x384xf32> to vector<1x384xf32>
    %c0_13 = arith.constant 0 : index
    %c0_14 = arith.constant 0 : index
    %c0_15 = arith.constant 0 : index
    %9 = vector.load %arg7[%c0_13, %c0_14, %c0_15] : memref<1x384x8xbf16, #tpu.memory_space<vmem>>, vector<1x384x8xbf16>
    %10 = vector.shape_cast %9 : vector<1x384x8xbf16> to vector<384x8xbf16>
    %c0_16 = arith.constant 0 : index
    %c0_17 = arith.constant 0 : index
    %c0_18 = arith.constant 0 : index
    %11 = vector.load %arg8[%c0_16, %c0_17, %c0_18] : memref<1x1x8xf32, #tpu.memory_space<vmem>>, vector<1x1x8xf32>
    %12 = vector.shape_cast %11 : vector<1x1x8xf32> to vector<1x8xf32>
    %cst = arith.constant dense<0.000000e+00> : vector<16x400xf32>
    %13 = tpu.matmul %0, %2, %cst {dimension_numbers = #tpu.dot_dimension_numbers<[1], [0], [0], [1], [0, 0, 1, 1], [], []>} : vector<16x128xbf16>, vector<128x400xbf16>, vector<16x400xf32> -> vector<16x400xf32>
    %14 = vector.broadcast %4 : vector<1x400xf32> to vector<16x400xf32>
    %15 = arith.addf %13, %14 : vector<16x400xf32>
    %cst_19 = arith.constant 0.000000e+00 : f32
    %16 = vector.broadcast %cst_19 : f32 to vector<16x400xf32>
    %17 = arith.maximumf %15, %16 : vector<16x400xf32>
    %18 = arith.truncf %17 : vector<16x400xf32> to vector<16x400xbf16>
    %cst_20 = arith.constant dense<0.000000e+00> : vector<16x384xf32>
    %19 = tpu.matmul %18, %6, %cst_20 {dimension_numbers = #tpu.dot_dimension_numbers<[1], [0], [0], [1], [0, 0, 1, 1], [], []>} : vector<16x400xbf16>, vector<400x384xbf16>, vector<16x384xf32> -> vector<16x384xf32>
    %20 = vector.broadcast %8 : vector<1x384xf32> to vector<16x384xf32>
    %21 = arith.addf %19, %20 : vector<16x384xf32>
    %cst_21 = arith.constant 0.000000e+00 : f32
    %22 = vector.broadcast %cst_21 : f32 to vector<16x384xf32>
    %23 = arith.maximumf %21, %22 : vector<16x384xf32>
    %24 = arith.truncf %23 : vector<16x384xf32> to vector<16x384xbf16>
    %cst_22 = arith.constant dense<0.000000e+00> : vector<16x8xf32>
    %25 = tpu.matmul %24, %10, %cst_22 {dimension_numbers = #tpu.dot_dimension_numbers<[1], [0], [0], [1], [0, 0, 1, 1], [], []>} : vector<16x384xbf16>, vector<384x8xbf16>, vector<16x8xf32> -> vector<16x8xf32>
    %26 = vector.broadcast %12 : vector<1x8xf32> to vector<16x8xf32>
    %27 = arith.addf %25, %26 : vector<16x8xf32>
    %c0_23 = arith.constant 0 : index
    %c0_24 = arith.constant 0 : index
    %c0_25 = arith.constant 0 : index
    %28 = vector.load %arg9[%c0_23, %c0_24, %c0_25] : memref<1x16x8xf32, #tpu.memory_space<vmem>>, vector<1x16x8xf32>
    %29 = vector.shape_cast %28 : vector<1x16x8xf32> to vector<16x8xf32>
    %30 = vector.shape_cast %27 : vector<16x8xf32> to vector<1x16x8xf32>
    tpu.vector_store %arg9[%c0_23, %c0_24, %c0_25], %30 {strides = array<i32>} : memref<1x16x8xf32, #tpu.memory_space<vmem>>, vector<1x16x8xf32>,
    return
  }
  func.func @transform_0(%arg0: i32, %arg1: i32) -> (i32, i32) {
    %c0_i32 = arith.constant 0 : i32
    %c0_i32_0 = arith.constant 0 : i32
    return %arg1, %c0_i32 : i32, i32
  }
  func.func @transform_1(%arg0: i32, %arg1: i32) -> (i32, i32, i32) {
    %c0_i32 = arith.constant 0 : i32
    %c0_i32_0 = arith.constant 0 : i32
    %c0_i32_1 = arith.constant 0 : i32
    return %arg0, %c0_i32, %c0_i32_0 : i32, i32, i32
  }
  func.func @transform_2(%arg0: i32, %arg1: i32) -> (i32, i32, i32) {
    %c0_i32 = arith.constant 0 : i32
    %c0_i32_0 = arith.constant 0 : i32
    %c0_i32_1 = arith.constant 0 : i32
    return %arg0, %c0_i32, %c0_i32_0 : i32, i32, i32
  }
  func.func @transform_3(%arg0: i32, %arg1: i32) -> (i32, i32, i32) {
    %c0_i32 = arith.constant 0 : i32
    %c0_i32_0 = arith.constant 0 : i32
    %c0_i32_1 = arith.constant 0 : i32
    return %arg0, %c0_i32, %c0_i32_0 : i32, i32, i32
  }
  func.func @transform_4(%arg0: i32, %arg1: i32) -> (i32, i32, i32) {
    %c0_i32 = arith.constant 0 : i32
    %c0_i32_0 = arith.constant 0 : i32
    %c0_i32_1 = arith.constant 0 : i32
    return %arg0, %c0_i32, %c0_i32_0 : i32, i32, i32
  }
  func.func @transform_5(%arg0: i32, %arg1: i32) -> (i32, i32, i32) {
    %c0_i32 = arith.constant 0 : i32
    %c0_i32_0 = arith.constant 0 : i32
    %c0_i32_1 = arith.constant 0 : i32
    return %arg0, %c0_i32, %c0_i32_0 : i32, i32, i32
  }
  func.func @transform_6(%arg0: i32, %arg1: i32) -> (i32, i32, i32) {
    %c0_i32 = arith.constant 0 : i32
    %c0_i32_0 = arith.constant 0 : i32
    %c0_i32_1 = arith.constant 0 : i32
    return %arg0, %c0_i32, %c0_i32_0 : i32, i32, i32
  }
  func.func @transform_7(%arg0: i32, %arg1: i32) -> (i32, i32, i32) {
    %c0_i32 = arith.constant 0 : i32
    %c0_i32_0 = arith.constant 0 : i32
    return %arg0, %arg1, %c0_i32 : i32, i32, i32
  }
}

</mosaic_0001>

<llo_original>
// kernel: tpu_custom_call.1
$region0: #{tpu_custom_call.1}
  #allocation0 [shape = 'u32[]', space=smem, size = 0x4, offset = 0x4, fixed_abs, tag = 'smem constant byte address 0x4 - core index']
  #allocation1 [shape = 'u32[144,128]{1,0:T(1,128)}', space=vmem, size = 0x12000, scoped, tag = 'internal scratch']
  %s0 = inlined_call_operand.vmem [shape: bf16[16,128], index: 0, kind: input, shape index: {}]
  %s1 = inlined_call_operand.vmem [shape: bf16[2,128,400], index: 1, kind: input, shape index: {}]
  %s2 = inlined_call_operand.vmem [shape: f32[2,1,400], index: 2, kind: input, shape index: {}]
  %s3 = inlined_call_operand.vmem [shape: bf16[2,400,384], index: 3, kind: input, shape index: {}]
  %s4 = inlined_call_operand.vmem [shape: f32[2,1,384], index: 4, kind: input, shape index: {}]
  %s5 = inlined_call_operand.vmem [shape: bf16[2,384,8], index: 5, kind: input, shape index: {}]
  %s6 = inlined_call_operand.vmem [shape: f32[2,1,8], index: 6, kind: input, shape index: {}]
  %s7 = inlined_call_operand.vmem [shape: f32[2,16,8], index: 7, kind: output, shape index: {}]
  %s8 = sld [smem:[#allocation0]]
  $region61: #{tpu_custom_call.1} parent=0
    _
  %s10 = ssub.s32 1, %s8
  %s11 = scalar_select 0, %s10, %s8
  loop: start=0, step=1, limit=4
  $region2: #{tpu_custom_call.1} parent=0 // loop_pre_header
    _
  $region3: #{tpu_custom_call.1} parent=0 // loop_header
    %s13 = sphi 0, %s17
    %p14 = scmp.ge.s32.totalorder %s13, 4
    %s20 = sphi 0, %s32
    %s21 = sphi 0, %s28
    %s22 = sphi 0, %s20
    %s23 = sphi 0, %s21
    %s24 = sphi 0, %s22
    %s25 = sphi 0, %s23
    %s35 = sphi 0, %s37
    %s38 = sphi 0, %s35
    %s39 = sphi 0, %s38
    %s55 = sphi 0, %s39
    %s61 = sphi 0, %s63
    %s64 = sphi 0, %s61
    %s65 = sphi 0, %s64
    %s81 = sphi 0, %s65
    %s87 = sphi 0, %s89
    %s90 = sphi 0, %s87
    %s91 = sphi 0, %s90
    %s107 = sphi 0, %s91
    %s113 = sphi 0, %s115
    %s116 = sphi 0, %s113
    %s117 = sphi 0, %s116
    %s133 = sphi 0, %s117
    %s139 = sphi 0, %s141
    %s142 = sphi 0, %s139
    %s143 = sphi 0, %s142
    %s159 = sphi 0, %s143
    %s165 = sphi 0, %s167
    %s168 = sphi 0, %s165
    %s169 = sphi 0, %s168
    %s185 = sphi 0, %s169
    %s191 = sphi 0, %s193
    %s194 = sphi 0, %s191
    %s195 = sphi 0, %s194
    %s211 = sphi 0, %s195
    %s219 = sphi 0, %s221
    %s222 = sphi 0, %s219
    %s223 = sphi 0, %s222
    %s239 = sphi 0, %s223
  $region4: #{tpu_custom_call.1} parent=0 // loop_header_branch
    %16 = sbr.rel (%p14) target = $region8
  $region5: #{tpu_custom_call.1} parent=0 // loop_body
    %s18 = ssub.s32 %s13, 1
    %s19 = ssub.s32 %s13, 2
    %s26 = sadd.s32 1, %s21
    %p27 = scmp.ge.s32.totalorder %s26, 1
    %s28 = scalar_select %p27, 0, %s26
    %s29 = sadd.s32 1, %s20
    %s30 = scalar_select %p27, %s29, %s20
    %p31 = scmp.ge.s32.totalorder %s30, 2
    %s32 = scalar_select %p31, 0, %s30
    %s33 = ssub.s32 %s21, %s28
    %p34 = scmp.eq.s32.totalorder %s33, 0
    %s36 = sadd.s32 %s35, 1
    %s37 = scalar_select %p34, %s35, %s36
    %p40 = pneg %p34
    %p41 = scmp.eq.s32.totalorder %s13, 1
    %p42 = por %p40, %p41
    %p43 = scmp.ne.s32.totalorder %s35, %s38
    %p44 = scmp.eq.s32.totalorder %s13, 0
    %p45 = por %p43, %p44
    %p46 = scmp.ne.s32.totalorder %s35, %s38
    %p47 = scmp.eq.s32.totalorder %s18, 1
    %p48 = por %p46, %p47
    %p49 = scmp.ne.s32.totalorder %s38, %s39
    %p50 = scmp.eq.s32.totalorder %s18, 0
    %p51 = por %p49, %p50
    %p52 = scmp.ne.s32.totalorder %s38, %s39
    %p53 = scmp.eq.s32.totalorder %s19, 1
    %p54 = por %p52, %p53
    %p56 = scmp.ne.s32.totalorder %s39, %s55
    %p57 = scmp.eq.s32.totalorder %s19, 0
    %p58 = por %p56, %p57
    %s59 = ssub.s32 %s20, %s32
    %p60 = scmp.eq.s32.totalorder %s59, 0
    %s62 = sadd.s32 %s61, 1
    %s63 = scalar_select %p60, %s61, %s62
    %p66 = pneg %p60
    %p67 = scmp.eq.s32.totalorder %s13, 1
    %p68 = por %p66, %p67
    %p69 = scmp.ne.s32.totalorder %s61, %s64
    %p70 = scmp.eq.s32.totalorder %s13, 0
    %p71 = por %p69, %p70
    %p72 = scmp.ne.s32.totalorder %s61, %s64
    %p73 = scmp.eq.s32.totalorder %s18, 1
    %p74 = por %p72, %p73
    %p75 = scmp.ne.s32.totalorder %s64, %s65
    %p76 = scmp.eq.s32.totalorder %s18, 0
    %p77 = por %p75, %p76
    %p78 = scmp.ne.s32.totalorder %s64, %s65
    %p79 = scmp.eq.s32.totalorder %s19, 1
    %p80 = por %p78, %p79
    %p82 = scmp.ne.s32.totalorder %s65, %s81
    %p83 = scmp.eq.s32.totalorder %s19, 0
    %p84 = por %p82, %p83
    %s85 = ssub.s32 %s20, %s32
    %p86 = scmp.eq.s32.totalorder %s85, 0
    %s88 = sadd.s32 %s87, 1
    %s89 = scalar_select %p86, %s87, %s88
    %p92 = pneg %p86
    %p93 = scmp.eq.s32.totalorder %s13, 1
    %p94 = por %p92, %p93
    %p95 = scmp.ne.s32.totalorder %s87, %s90
    %p96 = scmp.eq.s32.totalorder %s13, 0
    %p97 = por %p95, %p96
    %p98 = scmp.ne.s32.totalorder %s87, %s90
    %p99 = scmp.eq.s32.totalorder %s18, 1
    %p100 = por %p98, %p99
    %p101 = scmp.ne.s32.totalorder %s90, %s91
    %p102 = scmp.eq.s32.totalorder %s18, 0
    %p103 = por %p101, %p102
    %p104 = scmp.ne.s32.totalorder %s90, %s91
    %p105 = scmp.eq.s32.totalorder %s19, 1
    %p106 = por %p104, %p105
    %p108 = scmp.ne.s32.totalorder %s91, %s107
    %p109 = scmp.eq.s32.totalorder %s19, 0
    %p110 = por %p108, %p109
    %s111 = ssub.s32 %s20, %s32
    %p112 = scmp.eq.s32.totalorder %s111, 0
    %s114 = sadd.s32 %s113, 1
    %s115 = scalar_select %p112, %s113, %s114
    %p118 = pneg %p112
    %p119 = scmp.eq.s32.totalorder %s13, 1
    %p120 = por %p118, %p119
    %p121 = scmp.ne.s32.totalorder %s113, %s116
    %p122 = scmp.eq.s32.totalorder %s13, 0
    %p123 = por %p121, %p122
    %p124 = scmp.ne.s32.totalorder %s113, %s116
    %p125 = scmp.eq.s32.totalorder %s18, 1
    %p126 = por %p124, %p125
    %p127 = scmp.ne.s32.totalorder %s116, %s117
    %p128 = scmp.eq.s32.totalorder %s18, 0
    %p129 = por %p127, %p128
    %p130 = scmp.ne.s32.totalorder %s116, %s117
    %p131 = scmp.eq.s32.totalorder %s19, 1
    %p132 = por %p130, %p131
    %p134 = scmp.ne.s32.totalorder %s117, %s133
    %p135 = scmp.eq.s32.totalorder %s19, 0
    %p136 = por %p134, %p135
    %s137 = ssub.s32 %s20, %s32
    %p138 = scmp.eq.s32.totalorder %s137, 0
    %s140 = sadd.s32 %s139, 1
    %s141 = scalar_select %p138, %s139, %s140
    %p144 = pneg %p138
    %p145 = scmp.eq.s32.totalorder %s13, 1
    %p146 = por %p144, %p145
    %p147 = scmp.ne.s32.totalorder %s139, %s142
    %p148 = scmp.eq.s32.totalorder %s13, 0
    %p149 = por %p147, %p148
    %p150 = scmp.ne.s32.totalorder %s139, %s142
    %p151 = scmp.eq.s32.totalorder %s18, 1
    %p152 = por %p150, %p151
    %p153 = scmp.ne.s32.totalorder %s142, %s143
    %p154 = scmp.eq.s32.totalorder %s18, 0
    %p155 = por %p153, %p154
    %p156 = scmp.ne.s32.totalorder %s142, %s143
    %p157 = scmp.eq.s32.totalorder %s19, 1
    %p158 = por %p156, %p157
    %p160 = scmp.ne.s32.totalorder %s143, %s159
    %p161 = scmp.eq.s32.totalorder %s19, 0
    %p162 = por %p160, %p161
    %s163 = ssub.s32 %s20, %s32
    %p164 = scmp.eq.s32.totalorder %s163, 0
    %s166 = sadd.s32 %s165, 1
    %s167 = scalar_select %p164, %s165, %s166
    %p170 = pneg %p164
    %p171 = scmp.eq.s32.totalorder %s13, 1
    %p172 = por %p170, %p171
    %p173 = scmp.ne.s32.totalorder %s165, %s168
    %p174 = scmp.eq.s32.totalorder %s13, 0
    %p175 = por %p173, %p174
    %p176 = scmp.ne.s32.totalorder %s165, %s168
    %p177 = scmp.eq.s32.totalorder %s18, 1
    %p178 = por %p176, %p177
    %p179 = scmp.ne.s32.totalorder %s168, %s169
    %p180 = scmp.eq.s32.totalorder %s18, 0
    %p181 = por %p179, %p180
    %p182 = scmp.ne.s32.totalorder %s168, %s169
    %p183 = scmp.eq.s32.totalorder %s19, 1
    %p184 = por %p182, %p183
    %p186 = scmp.ne.s32.totalorder %s169, %s185
    %p187 = scmp.eq.s32.totalorder %s19, 0
    %p188 = por %p186, %p187
    %s189 = ssub.s32 %s20, %s32
    %p190 = scmp.eq.s32.totalorder %s189, 0
    %s192 = sadd.s32 %s191, 1
    %s193 = scalar_select %p190, %s191, %s192
    %p196 = pneg %p190
    %p197 = scmp.eq.s32.totalorder %s13, 1
    %p198 = por %p196, %p197
    %p199 = scmp.ne.s32.totalorder %s191, %s194
    %p200 = scmp.eq.s32.totalorder %s13, 0
    %p201 = por %p199, %p200
    %p202 = scmp.ne.s32.totalorder %s191, %s194
    %p203 = scmp.eq.s32.totalorder %s18, 1
    %p204 = por %p202, %p203
    %p205 = scmp.ne.s32.totalorder %s194, %s195
    %p206 = scmp.eq.s32.totalorder %s18, 0
    %p207 = por %p205, %p206
    %p208 = scmp.ne.s32.totalorder %s194, %s195
    %p209 = scmp.eq.s32.totalorder %s19, 1
    %p210 = por %p208, %p209
    %p212 = scmp.ne.s32.totalorder %s195, %s211
    %p213 = scmp.eq.s32.totalorder %s19, 0
    %p214 = por %p212, %p213
    %s215 = ssub.s32 %s20, %s32
    %s216 = ssub.s32 %s21, %s28
    %s217 = sor.u32 %s215, %s216
    %p218 = scmp.eq.s32.totalorder %s217, 0
    %s220 = sadd.s32 %s219, 1
    %s221 = scalar_select %p218, %s219, %s220
    %p224 = pneg %p218
    %p225 = scmp.eq.s32.totalorder %s13, 1
    %p226 = por %p224, %p225
    %p227 = scmp.ne.s32.totalorder %s219, %s222
    %p228 = scmp.eq.s32.totalorder %s13, 0
    %p229 = por %p227, %p228
    %p230 = scmp.ne.s32.totalorder %s219, %s222
    %p231 = scmp.eq.s32.totalorder %s18, 1
    %p232 = por %p230, %p231
    %p233 = scmp.ne.s32.totalorder %s222, %s223
    %p234 = scmp.eq.s32.totalorder %s18, 0
    %p235 = por %p233, %p234
    %p236 = scmp.ne.s32.totalorder %s222, %s223
    %p237 = scmp.eq.s32.totalorder %s19, 1
    %p238 = por %p236, %p237
    %p240 = scmp.ne.s32.totalorder %s223, %s239
    %p241 = scmp.eq.s32.totalorder %s19, 0
    %p242 = por %p240, %p241
    %p243 = scmp.le.s32.totalorder 1, %s13
    %p244 = scmp.lt.s32.totalorder %s13, 3
    %p245 = pnand %p243, %p244
    %p246 = pneg %p245
    // Predicated region
    $region9: #{tpu_custom_call.1} parent=5 // pred_check
      _
    $region10: #{tpu_custom_call.1} parent=5 // pred_check_branch
      %248 = sbr.rel (%p245) target = $region12
    $region11: #{tpu_custom_call.1} parent=5 // pred_region
      %s249 = ssub.s32 %s13, 1
      // Predicated region
      $region13: #{tpu_custom_call.1} parent=11 // pred_check
        %p250 = pneg %p51
      $region14: #{tpu_custom_call.1} parent=11 // pred_check_branch
        %252 = sbr.rel (%p250) target = $region16
      $region15: #{tpu_custom_call.1} parent=11 // pred_region
        %s253 = smul.u32 2, %s23
        %p254 = scmp.lt.s32.totalorder %s253, 1
        %s255 = scalar_select %p254, %s253, 1
        %s256 = smul.addr %s255, 4
        %s257 = scalar_lea.vmem %s0, %s256
        %s258 = smul.u32 2, %s23
      $region16: #{tpu_custom_call.1} parent=11 // pred_fallthru
        _
    $region12: #{tpu_custom_call.1} parent=5 // pred_fallthru
      _
    %p259 = scmp.lt.s32.totalorder %s13, 2
    // Predicated region
    $region17: #{tpu_custom_call.1} parent=5 // pred_check
      %p260 = pneg %p259
    $region18: #{tpu_custom_call.1} parent=5 // pred_check_branch
      %262 = sbr.rel (%p260) target = $region20
    $region19: #{tpu_custom_call.1} parent=5 // pred_region
      // Predicated region
      $region21: #{tpu_custom_call.1} parent=19 // pred_check
        %p263 = pneg %p71
      $region22: #{tpu_custom_call.1} parent=19 // pred_check_branch
        %265 = sbr.rel (%p263) target = $region24
      $region23: #{tpu_custom_call.1} parent=19 // pred_region
        %p266 = scmp.lt.s32.totalorder %s20, 1
        %s267 = scalar_select %p266, %s20, 1
        %s268 = smul.addr %s267, 64
        %s269 = smul.addr %s268, 4
        %s270 = scalar_lea.vmem %s1, %s269
      $region24: #{tpu_custom_call.1} parent=19 // pred_fallthru
        _
      // Predicated region
      $region25: #{tpu_custom_call.1} parent=19 // pred_check
        %p271 = pneg %p97
      $region26: #{tpu_custom_call.1} parent=19 // pred_check_branch
        %273 = sbr.rel (%p271) target = $region28
      $region27: #{tpu_custom_call.1} parent=19 // pred_region
        %p274 = scmp.lt.s32.totalorder %s20, 1
        %s275 = scalar_select %p274, %s20, 1
        %s276 = smul.addr %s275, 4
        %s277 = scalar_lea.vmem %s2, %s276
      $region28: #{tpu_custom_call.1} parent=19 // pred_fallthru
        _
      // Predicated region
      $region29: #{tpu_custom_call.1} parent=19 // pred_check
        %p278 = pneg %p123
      $region30: #{tpu_custom_call.1} parent=19 // pred_check_branch
        %280 = sbr.rel (%p278) target = $region32
      $region31: #{tpu_custom_call.1} parent=19 // pred_region
        %p281 = scmp.lt.s32.totalorder %s20, 1
        %s282 = scalar_select %p281, %s20, 1
        %s283 = smul.addr %s282, 150
        %s284 = smul.addr %s283, 4
        %s285 = scalar_lea.vmem %s3, %s284
      $region32: #{tpu_custom_call.1} parent=19 // pred_fallthru
        _
      // Predicated region
      $region33: #{tpu_custom_call.1} parent=19 // pred_check
        %p286 = pneg %p149
      $region34: #{tpu_custom_call.1} parent=19 // pred_check_branch
        %288 = sbr.rel (%p286) target = $region36
      $region35: #{tpu_custom_call.1} parent=19 // pred_region
        %p289 = scmp.lt.s32.totalorder %s20, 1
        %s290 = scalar_select %p289, %s20, 1
        %s291 = smul.addr %s290, 3
        %s292 = scalar_lea.vmem %s4, %s291
      $region36: #{tpu_custom_call.1} parent=19 // pred_fallthru
        _
      // Predicated region
      $region37: #{tpu_custom_call.1} parent=19 // pred_check
        %p293 = pneg %p175
      $region38: #{tpu_custom_call.1} parent=19 // pred_check_branch
        %295 = sbr.rel (%p293) target = $region40
      $region39: #{tpu_custom_call.1} parent=19 // pred_region
        %p296 = scmp.lt.s32.totalorder %s20, 1
        %s297 = scalar_select %p296, %s20, 1
        %s298 = smul.addr %s297, 48
        %s299 = smul.addr %s298, 4
        %s300 = scalar_lea.vmem %s5, %s299
      $region40: #{tpu_custom_call.1} parent=19 // pred_fallthru
        _
      // Predicated region
      $region41: #{tpu_custom_call.1} parent=19 // pred_check
        %p301 = pneg %p201
      $region42: #{tpu_custom_call.1} parent=19 // pred_check_branch
        %303 = sbr.rel (%p301) target = $region44
      $region43: #{tpu_custom_call.1} parent=19 // pred_region
        %p304 = scmp.lt.s32.totalorder %s20, 1
        %s305 = scalar_select %p304, %s20, 1
        %s306 = scalar_lea.vmem %s6, %s305
      $region44: #{tpu_custom_call.1} parent=19 // pred_fallthru
        _
    $region20: #{tpu_custom_call.1} parent=5 // pred_fallthru
      _
    %p307 = scmp.le.s32.totalorder 1, %s13
    %p308 = scmp.lt.s32.totalorder %s13, 3
    %p309 = pnand %p307, %p308
    %p310 = pneg %p309
    // Predicated region
    $region45: #{tpu_custom_call.1} parent=5 // pred_check
      _
    $region46: #{tpu_custom_call.1} parent=5 // pred_check_branch
      %312 = sbr.rel (%p309) target = $region48
    $region47: #{tpu_custom_call.1} parent=5 // pred_region
      %s313 = ssub.s32 %s13, 1
      %s314 = smul.u32 2, %s23
      %p315 = scmp.lt.s32.totalorder %s314, 1
      %s316 = scalar_select %p315, %s314, 1
      %s317 = smul.addr %s316, 4
      %s318 = scalar_lea.vmem %s0, %s317
      %p319 = pneg %p51
      %p320 = pneg %p48
      %p321 = scmp.lt.s32.totalorder %s22, 1
      %s322 = scalar_select %p321, %s22, 1
      %s323 = smul.addr %s322, 64
      %s324 = smul.addr %s323, 4
      %s325 = scalar_lea.vmem %s1, %s324
      %p326 = pneg %p77
      %p327 = pneg %p74
      %p328 = scmp.lt.s32.totalorder %s22, 1
      %s329 = scalar_select %p328, %s22, 1
      %s330 = smul.addr %s329, 4
      %s331 = scalar_lea.vmem %s2, %s330
      %p332 = pneg %p103
      %p333 = pneg %p100
      %p334 = scmp.lt.s32.totalorder %s22, 1
      %s335 = scalar_select %p334, %s22, 1
      %s336 = smul.addr %s335, 150
      %s337 = smul.addr %s336, 4
      %s338 = scalar_lea.vmem %s3, %s337
      %p339 = pneg %p129
      %p340 = pneg %p126
      %p341 = scmp.lt.s32.totalorder %s22, 1
      %s342 = scalar_select %p341, %s22, 1
      %s343 = smul.addr %s342, 3
      %s344 = scalar_lea.vmem %s4, %s343
      %p345 = pneg %p155
      %p346 = pneg %p152
      %p347 = scmp.lt.s32.totalorder %s22, 1
      %s348 = scalar_select %p347, %s22, 1
      %s349 = smul.addr %s348, 48
      %s350 = smul.addr %s349, 4
      %s351 = scalar_lea.vmem %s5, %s350
      %p352 = pneg %p181
      %p353 = pneg %p178
      %p354 = scmp.lt.s32.totalorder %s22, 1
      %s355 = scalar_select %p354, %s22, 1
      %s356 = scalar_lea.vmem %s6, %s355
      %p357 = pneg %p207
      %p358 = pneg %p204
      %p359 = pneg %p235
      %p360 = pneg %p232
      %s361 = smul.u32 2, %s23
      %p362 = scmp.lt.s32.totalorder %s22, 1
      %s363 = scalar_select %p362, %s22, 1
      %p364 = scmp.lt.s32.totalorder %s361, 1
      %s365 = scalar_select %p364, %s361, 1
      %s366 = smul.addr %s363, 2
      %s367 = sadd.s32 %s365, %s366
      %s368 = smul.addr %s367, 8
      %s369 = scalar_lea.vmem %s7, %s368
      %s370 = smul.u32 2, %s23
      %p371 = scmp.lt.s32.totalorder %s370, 1
      %s372 = scalar_select %p371, %s370, 1
      %s373 = smul.addr %s372, 4
      %s374 = scalar_lea.vmem %s0, %s373
      %s375 = smul.u32 2, %s23
      %p376 = scmp.lt.s32.totalorder %s22, 1
      %s377 = scalar_select %p376, %s22, 1
      %s378 = smul.addr %s377, 64
      %s379 = smul.addr %s378, 4
      %s380 = scalar_lea.vmem %s1, %s379
      %p381 = scmp.lt.s32.totalorder %s22, 1
      %s382 = scalar_select %p381, %s22, 1
      %s383 = smul.addr %s382, 4
      %s384 = scalar_lea.vmem %s2, %s383
      %p385 = scmp.lt.s32.totalorder %s22, 1
      %s386 = scalar_select %p385, %s22, 1
      %s387 = smul.addr %s386, 150
      %s388 = smul.addr %s387, 4
      %s389 = scalar_lea.vmem %s3, %s388
      %p390 = scmp.lt.s32.totalorder %s22, 1
      %s391 = scalar_select %p390, %s22, 1
      %s392 = smul.addr %s391, 3
      %s393 = scalar_lea.vmem %s4, %s392
      %p394 = scmp.lt.s32.totalorder %s22, 1
      %s395 = scalar_select %p394, %s22, 1
      %s396 = smul.addr %s395, 48
      %s397 = smul.addr %s396, 4
      %s398 = scalar_lea.vmem %s5, %s397
      %p399 = scmp.lt.s32.totalorder %s22, 1
      %s400 = scalar_select %p399, %s22, 1
      %s401 = scalar_lea.vmem %s6, %s400
      %s402 = smul.u32 2, %s23
      %p403 = scmp.lt.s32.totalorder %s22, 1
      %s404 = scalar_select %p403, %s22, 1
      %p405 = scmp.lt.s32.totalorder %s402, 1
      %s406 = scalar_select %p405, %s402, 1
      %s407 = smul.addr %s404, 2
      %s408 = sadd.s32 %s406, %s407
      %s409 = smul.addr %s408, 8
      %s410 = scalar_lea.vmem %s7, %s409
      %s411 = smul.u32 2, %s23
      %v413 = vld [vmem:[%s374] sm:$0xf]
      %v414 = vld [vmem:[%s374 + $0x4] sm:$0xf]
      %v415 = vld [vmem:[%s380] sm:$0xff]
      %v416 = vld [vmem:[%s380 + $0x8] sm:$0xff]
      %v417 = vld [vmem:[%s380 + $0x10] sm:$0xff]
      %v418 = vld [vmem:[%s380 + $0x18] sm:$0xff]
      %v419 = vld [vmem:[%s380 + $0x20] sm:$0xff]
      %v420 = vld [vmem:[%s380 + $0x28] sm:$0xff]
      %v421 = vld [vmem:[%s380 + $0x30] sm:$0xff]
      %v422 = vld [vmem:[%s380 + $0x38] sm:$0xff]
      %v423 = vld [vmem:[%s380 + $0x40] sm:$0xff]
      %v424 = vld [vmem:[%s380 + $0x48] sm:$0xff]
      %v425 = vld [vmem:[%s380 + $0x50] sm:$0xff]
      %v426 = vld [vmem:[%s380 + $0x58] sm:$0xff]
      %v427 = vld [vmem:[%s380 + $0x60] sm:$0xff]
      %v428 = vld [vmem:[%s380 + $0x68] sm:$0xff]
      %v429 = vld [vmem:[%s380 + $0x70] sm:$0xff]
      %v430 = vld [vmem:[%s380 + $0x78] sm:$0xff]
      %v431 = vld [vmem:[%s380 + $0x80] sm:$0xff]
      %v432 = vld [vmem:[%s380 + $0x88] sm:$0xff]
      %v433 = vld [vmem:[%s380 + $0x90] sm:$0xff]
      %v434 = vld [vmem:[%s380 + $0x98] sm:$0xff]
      %v435 = vld [vmem:[%s380 + $0xa0] sm:$0xff]
      %v436 = vld [vmem:[%s380 + $0xa8] sm:$0xff]
      %v437 = vld [vmem:[%s380 + $0xb0] sm:$0xff]
      %v438 = vld [vmem:[%s380 + $0xb8] sm:$0xff]
      %v439 = vld [vmem:[%s380 + $0xc0] sm:$0xff]
      %v440 = vld [vmem:[%s380 + $0xc8] sm:$0xff]
      %v441 = vld [vmem:[%s380 + $0xd0] sm:$0xff]
      %v442 = vld [vmem:[%s380 + $0xd8] sm:$0xff]
      %v443 = vld [vmem:[%s380 + $0xe0] sm:$0xff]
      %v444 = vld [vmem:[%s380 + $0xe8] sm:$0xff]
      %v445 = vld [vmem:[%s380 + $0xf0] sm:$0xff]
      %v446 = vld [vmem:[%s380 + $0xf8] sm:$0xff]
      %v447 = vld [vmem:[%s384] sm:$0xf]
      %v448 = vld [vmem:[%s389] sm:$0xff]
      %v449 = vld [vmem:[%s389 + $0x8] sm:$0xf]
      %v450 = vld [vmem:[%s389 + $0xc] sm:$0xff]
      %v451 = vld [vmem:[%s389 + $0x14] sm:$0xf]
      %v452 = vld [vmem:[%s389 + $0x18] sm:$0xff]
      %v453 = vld [vmem:[%s389 + $0x20] sm:$0xf]
      %v454 = vld [vmem:[%s389 + $0x24] sm:$0xff]
      %v455 = vld [vmem:[%s389 + $0x2c] sm:$0xf]
      %v456 = vld [vmem:[%s389 + $0x30] sm:$0xff]
      %v457 = vld [vmem:[%s389 + $0x38] sm:$0xf]
      %v458 = vld [vmem:[%s389 + $0x3c] sm:$0xff]
      %v459 = vld [vmem:[%s389 + $0x44] sm:$0xf]
      %v460 = vld [vmem:[%s389 + $0x48] sm:$0xff]
      %v461 = vld [vmem:[%s389 + $0x50] sm:$0xf]
      %v462 = vld [vmem:[%s389 + $0x54] sm:$0xff]
      %v463 = vld [vmem:[%s389 + $0x5c] sm:$0xf]
      %v464 = vld [vmem:[%s389 + $0x60] sm:$0xff]
      %v465 = vld [vmem:[%s389 + $0x68] sm:$0xf]
      %v466 = vld [vmem:[%s389 + $0x6c] sm:$0xff]
      %v467 = vld [vmem:[%s389 + $0x74] sm:$0xf]
      %v468 = vld [vmem:[%s389 + $0x78] sm:$0xff]
      %v469 = vld [vmem:[%s389 + $0x80] sm:$0xf]
      %v470 = vld [vmem:[%s389 + $0x84] sm:$0xff]
      %v471 = vld [vmem:[%s389 + $0x8c] sm:$0xf]
      %v472 = vld [vmem:[%s389 + $0x90] sm:$0xff]
      %v473 = vld [vmem:[%s389 + $0x98] sm:$0xf]
      %v474 = vld [vmem:[%s389 + $0x9c] sm:$0xff]
      %v475 = vld [vmem:[%s389 + $0xa4] sm:$0xf]
      %v476 = vld [vmem:[%s389 + $0xa8] sm:$0xff]
      %v477 = vld [vmem:[%s389 + $0xb0] sm:$0xf]
      %v478 = vld [vmem:[%s389 + $0xb4] sm:$0xff]
      %v479 = vld [vmem:[%s389 + $0xbc] sm:$0xf]
      %v480 = vld [vmem:[%s389 + $0xc0] sm:$0xff]
      %v481 = vld [vmem:[%s389 + $0xc8] sm:$0xf]
      %v482 = vld [vmem:[%s389 + $0xcc] sm:$0xff]
      %v483 = vld [vmem:[%s389 + $0xd4] sm:$0xf]
      %v484 = vld [vmem:[%s389 + $0xd8] sm:$0xff]
      %v485 = vld [vmem:[%s389 + $0xe0] sm:$0xf]
      %v486 = vld [vmem:[%s389 + $0xe4] sm:$0xff]
      %v487 = vld [vmem:[%s389 + $0xec] sm:$0xf]
      %v488 = vld [vmem:[%s389 + $0xf0] sm:$0xff]
      %v489 = vld [vmem:[%s389 + $0xf8] sm:$0xf]
      %v490 = vld [vmem:[%s389 + $0xfc] sm:$0xff]
      %v491 = vld [vmem:[%s389 + $0x104] sm:$0xf]
      %v492 = vld [vmem:[%s389 + $0x108] sm:$0xff]
      %v493 = vld [vmem:[%s389 + $0x110] sm:$0xf]
      %v494 = vld [vmem:[%s389 + $0x114] sm:$0xff]
      %v495 = vld [vmem:[%s389 + $0x11c] sm:$0xf]
      %v496 = vld [vmem:[%s389 + $0x120] sm:$0xff]
      %v497 = vld [vmem:[%s389 + $0x128] sm:$0xf]
      %v498 = vld [vmem:[%s389 + $0x12c] sm:$0xff]
      %v499 = vld [vmem:[%s389 + $0x134] sm:$0xf]
      %v500 = vld [vmem:[%s389 + $0x138] sm:$0xff]
      %v501 = vld [vmem:[%s389 + $0x140] sm:$0xf]
      %v502 = vld [vmem:[%s389 + $0x144] sm:$0xff]
      %v503 = vld [vmem:[%s389 + $0x14c] sm:$0xf]
      %v504 = vld [vmem:[%s389 + $0x150] sm:$0xff]
      %v505 = vld [vmem:[%s389 + $0x158] sm:$0xf]
      %v506 = vld [vmem:[%s389 + $0x15c] sm:$0xff]
      %v507 = vld [vmem:[%s389 + $0x164] sm:$0xf]
      %v508 = vld [vmem:[%s389 + $0x168] sm:$0xff]
      %v509 = vld [vmem:[%s389 + $0x170] sm:$0xf]
      %v510 = vld [vmem:[%s389 + $0x174] sm:$0xff]
      %v511 = vld [vmem:[%s389 + $0x17c] sm:$0xf]
      %v512 = vld [vmem:[%s389 + $0x180] sm:$0xff]
      %v513 = vld [vmem:[%s389 + $0x188] sm:$0xf]
      %v514 = vld [vmem:[%s389 + $0x18c] sm:$0xff]
      %v515 = vld [vmem:[%s389 + $0x194] sm:$0xf]
      %v516 = vld [vmem:[%s389 + $0x198] sm:$0xff]
      %v517 = vld [vmem:[%s389 + $0x1a0] sm:$0xf]
      %v518 = vld [vmem:[%s389 + $0x1a4] sm:$0xff]
      %v519 = vld [vmem:[%s389 + $0x1ac] sm:$0xf]
      %v520 = vld [vmem:[%s389 + $0x1b0] sm:$0xff]
      %v521 = vld [vmem:[%s389 + $0x1b8] sm:$0xf]
      %v522 = vld [vmem:[%s389 + $0x1bc] sm:$0xff]
      %v523 = vld [vmem:[%s389 + $0x1c4] sm:$0xf]
      %v524 = vld [vmem:[%s389 + $0x1c8] sm:$0xff]
      %v525 = vld [vmem:[%s389 + $0x1d0] sm:$0xf]
      %v526 = vld [vmem:[%s389 + $0x1d4] sm:$0xff]
      %v527 = vld [vmem:[%s389 + $0x1dc] sm:$0xf]
      %v528 = vld [vmem:[%s389 + $0x1e0] sm:$0xff]
      %v529 = vld [vmem:[%s389 + $0x1e8] sm:$0xf]
      %v530 = vld [vmem:[%s389 + $0x1ec] sm:$0xff]
      %v531 = vld [vmem:[%s389 + $0x1f4] sm:$0xf]
      %v532 = vld [vmem:[%s389 + $0x1f8] sm:$0xff]
      %v533 = vld [vmem:[%s389 + $0x200] sm:$0xf]
      %v534 = vld [vmem:[%s389 + $0x204] sm:$0xff]
      %v535 = vld [vmem:[%s389 + $0x20c] sm:$0xf]
      %v536 = vld [vmem:[%s389 + $0x210] sm:$0xff]
      %v537 = vld [vmem:[%s389 + $0x218] sm:$0xf]
      %v538 = vld [vmem:[%s389 + $0x21c] sm:$0xff]
      %v539 = vld [vmem:[%s389 + $0x224] sm:$0xf]
      %v540 = vld [vmem:[%s389 + $0x228] sm:$0xff]
      %v541 = vld [vmem:[%s389 + $0x230] sm:$0xf]
      %v542 = vld [vmem:[%s389 + $0x234] sm:$0xff]
      %v543 = vld [vmem:[%s389 + $0x23c] sm:$0xf]
      %v544 = vld [vmem:[%s389 + $0x240] sm:$0xff]
      %v545 = vld [vmem:[%s389 + $0x248] sm:$0xf]
      %v546 = vld [vmem:[%s389 + $0x24c] sm:$0xff]
      %v547 = vld [vmem:[%s389 + $0x254] sm:$0xf]
      %v548 = vld [vmem:[%s393] sm:$0x7]
      %v549 = vld [vmem:[%s398] sm:$0xf]
      %v550 = vld [vmem:[%s398 + $0x4] sm:$0xf]
      %v551 = vld [vmem:[%s398 + $0x8] sm:$0xf]
      %v552 = vld [vmem:[%s398 + $0xc] sm:$0xf]
      %v553 = vld [vmem:[%s398 + $0x10] sm:$0xf]
      %v554 = vld [vmem:[%s398 + $0x14] sm:$0xf]
      %v555 = vld [vmem:[%s398 + $0x18] sm:$0xf]
      %v556 = vld [vmem:[%s398 + $0x1c] sm:$0xf]
      %v557 = vld [vmem:[%s398 + $0x20] sm:$0xf]
      %v558 = vld [vmem:[%s398 + $0x24] sm:$0xf]
      %v559 = vld [vmem:[%s398 + $0x28] sm:$0xf]
      %v560 = vld [vmem:[%s398 + $0x2c] sm:$0xf]
      %v561 = vld [vmem:[%s398 + $0x30] sm:$0xf]
      %v562 = vld [vmem:[%s398 + $0x34] sm:$0xf]
      %v563 = vld [vmem:[%s398 + $0x38] sm:$0xf]
      %v564 = vld [vmem:[%s398 + $0x3c] sm:$0xf]
      %v565 = vld [vmem:[%s398 + $0x40] sm:$0xf]
      %v566 = vld [vmem:[%s398 + $0x44] sm:$0xf]
      %v567 = vld [vmem:[%s398 + $0x48] sm:$0xf]
      %v568 = vld [vmem:[%s398 + $0x4c] sm:$0xf]
      %v569 = vld [vmem:[%s398 + $0x50] sm:$0xf]
      %v570 = vld [vmem:[%s398 + $0x54] sm:$0xf]
      %v571 = vld [vmem:[%s398 + $0x58] sm:$0xf]
      %v572 = vld [vmem:[%s398 + $0x5c] sm:$0xf]
      %v573 = vld [vmem:[%s398 + $0x60] sm:$0xf]
      %v574 = vld [vmem:[%s398 + $0x64] sm:$0xf]
      %v575 = vld [vmem:[%s398 + $0x68] sm:$0xf]
      %v576 = vld [vmem:[%s398 + $0x6c] sm:$0xf]
      %v577 = vld [vmem:[%s398 + $0x70] sm:$0xf]
      %v578 = vld [vmem:[%s398 + $0x74] sm:$0xf]
      %v579 = vld [vmem:[%s398 + $0x78] sm:$0xf]
      %v580 = vld [vmem:[%s398 + $0x7c] sm:$0xf]
      %v581 = vld [vmem:[%s398 + $0x80] sm:$0xf]
      %v582 = vld [vmem:[%s398 + $0x84] sm:$0xf]
      %v583 = vld [vmem:[%s398 + $0x88] sm:$0xf]
      %v584 = vld [vmem:[%s398 + $0x8c] sm:$0xf]
      %v585 = vld [vmem:[%s398 + $0x90] sm:$0xf]
      %v586 = vld [vmem:[%s398 + $0x94] sm:$0xf]
      %v587 = vld [vmem:[%s398 + $0x98] sm:$0xf]
      %v588 = vld [vmem:[%s398 + $0x9c] sm:$0xf]
      %v589 = vld [vmem:[%s398 + $0xa0] sm:$0xf]
      %v590 = vld [vmem:[%s398 + $0xa4] sm:$0xf]
      %v591 = vld [vmem:[%s398 + $0xa8] sm:$0xf]
      %v592 = vld [vmem:[%s398 + $0xac] sm:$0xf]
      %v593 = vld [vmem:[%s398 + $0xb0] sm:$0xf]
      %v594 = vld [vmem:[%s398 + $0xb4] sm:$0xf]
      %v595 = vld [vmem:[%s398 + $0xb8] sm:$0xf]
      %v596 = vld [vmem:[%s398 + $0xbc] sm:$0xf]
      %v597 = vld [vmem:[%s401] sm:$0x1]
      %v599 = vlaneseq
      %v600 = vshrl.u32 %v599, 7
      %v601 = vsub.s32 0, %v600
      %v602 = vrot.slane %v447, %v601
      %v603 = vlaneseq
      %v604 = vshrl.u32 %v603, 7
      %v605 = vsub.s32 1, %v604
      %v606 = vrot.slane %v447, %v605
      %v607 = vlaneseq
      %v608 = vshrl.u32 %v607, 7
      %v609 = vsub.s32 2, %v608
      %v610 = vrot.slane %v447, %v609
      %v611 = vlaneseq
      %v612 = vshrl.u32 %v611, 7
      %v613 = vsub.s32 3, %v612
      %v614 = vrot.slane %v447, %v613
      %v621 = vunpack.c.l.b16 %v413
      %v622 = vunpack.c.l.b16 %v414
      %v623 = vpack.c.b16 %v622, %v621
      %v657 = vunpack.c.l.b16 %v415
      %v658 = vunpack.c.h.b16 %v415
      %v659 = vunpack.c.l.b16 %v416
      %v660 = vunpack.c.h.b16 %v416
      %v661 = vunpack.c.l.b16 %v417
      %v662 = vunpack.c.h.b16 %v417
      %v663 = vunpack.c.l.b16 %v418
      %v664 = vunpack.c.h.b16 %v418
      %v665 = vunpack.c.l.b16 %v419
      %v666 = vunpack.c.h.b16 %v419
      %v667 = vunpack.c.l.b16 %v420
      %v668 = vunpack.c.h.b16 %v420
      %v669 = vunpack.c.l.b16 %v421
      %v670 = vunpack.c.h.b16 %v421
      %v671 = vunpack.c.l.b16 %v422
      %v672 = vunpack.c.h.b16 %v422
      %v673 = vunpack.c.l.b16 %v423
      %v674 = vunpack.c.h.b16 %v423
      %v675 = vunpack.c.l.b16 %v424
      %v676 = vunpack.c.h.b16 %v424
      %v677 = vunpack.c.l.b16 %v425
      %v678 = vunpack.c.h.b16 %v425
      %v679 = vunpack.c.l.b16 %v426
      %v680 = vunpack.c.h.b16 %v426
      %v681 = vunpack.c.l.b16 %v427
      %v682 = vunpack.c.h.b16 %v427
      %v683 = vunpack.c.l.b16 %v428
      %v684 = vunpack.c.h.b16 %v428
      %v685 = vunpack.c.l.b16 %v429
      %v686 = vunpack.c.h.b16 %v429
      %v687 = vunpack.c.l.b16 %v430
      %v688 = vunpack.c.h.b16 %v430
      %v689 = vunpack.c.l.b16 %v431
      %v690 = vunpack.c.h.b16 %v431
      %v691 = vunpack.c.l.b16 %v432
      %v692 = vunpack.c.h.b16 %v432
      %v693 = vunpack.c.l.b16 %v433
      %v694 = vunpack.c.h.b16 %v433
      %v695 = vunpack.c.l.b16 %v434
      %v696 = vunpack.c.h.b16 %v434
      %v697 = vunpack.c.l.b16 %v435
      %v698 = vunpack.c.h.b16 %v435
      %v699 = vunpack.c.l.b16 %v436
      %v700 = vunpack.c.h.b16 %v436
      %v701 = vunpack.c.l.b16 %v437
      %v702 = vunpack.c.h.b16 %v437
      %v703 = vunpack.c.l.b16 %v438
      %v704 = vunpack.c.h.b16 %v438
      %v705 = vunpack.c.l.b16 %v439
      %v706 = vunpack.c.h.b16 %v439
      %v707 = vunpack.c.l.b16 %v440
      %v708 = vunpack.c.h.b16 %v440
      %v709 = vunpack.c.l.b16 %v441
      %v710 = vunpack.c.h.b16 %v441
      %v711 = vunpack.c.l.b16 %v442
      %v712 = vunpack.c.h.b16 %v442
      %v713 = vunpack.c.l.b16 %v443
      %v714 = vunpack.c.h.b16 %v443
      %v715 = vunpack.c.l.b16 %v444
      %v716 = vunpack.c.h.b16 %v444
      %v717 = vunpack.c.l.b16 %v445
      %v718 = vunpack.c.h.b16 %v445
      %v719 = vunpack.c.l.b16 %v446
      %v720 = vunpack.c.h.b16 %v446
      %v721 = vpack.c.b16 %v661, %v657
      %v722 = vpack.c.b16 %v662, %v658
      %v723 = vpack.c.b16 %v663, %v659
      %v724 = vpack.c.b16 %v664, %v660
      %v725 = vpack.c.b16 %v669, %v665
      %v726 = vpack.c.b16 %v670, %v666
      %v727 = vpack.c.b16 %v671, %v667
      %v728 = vpack.c.b16 %v672, %v668
      %v729 = vpack.c.b16 %v677, %v673
      %v730 = vpack.c.b16 %v678, %v674
      %v731 = vpack.c.b16 %v679, %v675
      %v732 = vpack.c.b16 %v680, %v676
      %v733 = vpack.c.b16 %v685, %v681
      %v734 = vpack.c.b16 %v686, %v682
      %v735 = vpack.c.b16 %v687, %v683
      %v736 = vpack.c.b16 %v688, %v684
      %v737 = vpack.c.b16 %v693, %v689
      %v738 = vpack.c.b16 %v694, %v690
      %v739 = vpack.c.b16 %v695, %v691
      %v740 = vpack.c.b16 %v696, %v692
      %v741 = vpack.c.b16 %v701, %v697
      %v742 = vpack.c.b16 %v702, %v698
      %v743 = vpack.c.b16 %v703, %v699
      %v744 = vpack.c.b16 %v704, %v700
      %v745 = vpack.c.b16 %v709, %v705
      %v746 = vpack.c.b16 %v710, %v706
      %v747 = vpack.c.b16 %v711, %v707
      %v748 = vpack.c.b16 %v712, %v708
      %v749 = vpack.c.b16 %v717, %v713
      %v750 = vpack.c.b16 %v718, %v714
      %v751 = vpack.c.b16 %v719, %v715
      %v752 = vpack.c.b16 %v720, %v716
      %785 = vmatprep.subr.bf16.mxu0 %v722
      %786 = vmatpush1.bf16.msra.mxu0 %v721
      %787 = vmatprep.subr.bf16.mxu0 %v726
      %788 = vmatpush1.bf16.msra.mxu0 %v725
      %789 = vmatprep.subr.bf16.mxu0 %v730
      %790 = vmatpush1.bf16.msra.mxu0 %v729
      %791 = vmatprep.subr.bf16.mxu0 %v734
      %792 = vmatpush1.bf16.msra.mxu0 %v733
      %793 = vmatprep.subr.bf16.mxu0 %v738
      %794 = vmatpush1.bf16.msra.mxu0 %v737
      %795 = vmatprep.subr.bf16.mxu0 %v742
      %796 = vmatpush1.bf16.msra.mxu0 %v741
      %797 = vmatprep.subr.bf16.mxu0 %v746
      %798 = vmatpush1.bf16.msra.mxu0 %v745
      %799 = vmatprep.subr.bf16.mxu0 %v750
      %800 = vmatpush1.bf16.msra.mxu0 %v749
      %801 = vmatprep.subr.bf16.mxu0 0
      %802 = vmatpush1.bf16.msra.mxu0 0
      %803 = vmatprep.subr.bf16.mxu0 0
      %804 = vmatpush1.bf16.msra.mxu0 0
      %805 = vmatprep.subr.bf16.mxu0 0
      %806 = vmatpush1.bf16.msra.mxu0 0
      %807 = vmatprep.subr.bf16.mxu0 0
      %808 = vmatpush1.bf16.msra.mxu0 0
      %809 = vmatprep.subr.bf16.mxu0 0
      %810 = vmatpush1.bf16.msra.mxu0 0
      %811 = vmatprep.subr.bf16.mxu0 0
      %812 = vmatpush1.bf16.msra.mxu0 0
      %813 = vmatprep.subr.bf16.mxu0 0
      %814 = vmatpush1.bf16.msra.mxu0 0
      %815 = vmatprep.subr.bf16.mxu0 0
      %816 = vmatpush1.bf16.msra.mxu0 0
      %817 = vmatprep.mubr.bf16.mxu0 0
      %818 = vmatmul.mubr.bf16.gmra.mrb[0].mxu0 %v623
      %v819 = vpop.f32.mrb[0].mxu0
      %v820 = vadd.f32 %v602, %v819
      %v821 = vpop.f32.mrb[0].mxu0
      %v822 = vadd.f32 %v606, %v821
      %v823 = vpop.f32.mrb[0].mxu0
      %v824 = vadd.f32 %v602, %v823
      %v825 = vpop.f32.mrb[0].mxu0
      %v826 = vadd.f32 %v606, %v825
      %827 = vdwg.mxu0
      %828 = vmatprep.subr.bf16.mxu0 %v724
      %829 = vmatpush1.bf16.msra.mxu0 %v723
      %830 = vmatprep.subr.bf16.mxu0 %v728
      %831 = vmatpush1.bf16.msra.mxu0 %v727
      %832 = vmatprep.subr.bf16.mxu0 %v732
      %833 = vmatpush1.bf16.msra.mxu0 %v731
      %834 = vmatprep.subr.bf16.mxu0 %v736
      %835 = vmatpush1.bf16.msra.mxu0 %v735
      %836 = vmatprep.subr.bf16.mxu0 %v740
      %837 = vmatpush1.bf16.msra.mxu0 %v739
      %838 = vmatprep.subr.bf16.mxu0 %v744
      %839 = vmatpush1.bf16.msra.mxu0 %v743
      %840 = vmatprep.subr.bf16.mxu0 %v748
      %841 = vmatpush1.bf16.msra.mxu0 %v747
      %842 = vmatprep.subr.bf16.mxu0 %v752
      %843 = vmatpush1.bf16.msra.mxu0 %v751
      %844 = vmatprep.subr.bf16.mxu0 0
      %845 = vmatpush1.bf16.msra.mxu0 0
      %846 = vmatprep.subr.bf16.mxu0 0
      %847 = vmatpush1.bf16.msra.mxu0 0
      %848 = vmatprep.subr.bf16.mxu0 0
      %849 = vmatpush1.bf16.msra.mxu0 0
      %850 = vmatprep.subr.bf16.mxu0 0
      %851 = vmatpush1.bf16.msra.mxu0 0
      %852 = vmatprep.subr.bf16.mxu0 0
      %853 = vmatpush1.bf16.msra.mxu0 0
      %854 = vmatprep.subr.bf16.mxu0 0
      %855 = vmatpush1.bf16.msra.mxu0 0
      %856 = vmatprep.subr.bf16.mxu0 0
      %857 = vmatpush1.bf16.msra.mxu0 0
      %858 = vmatprep.subr.bf16.mxu0 0
      %859 = vmatpush1.bf16.msra.mxu0 0
      %860 = vmatprep.mubr.bf16.mxu0 0
      %861 = vmatmul.mubr.bf16.gmra.mrb[0].mxu0 %v623
      %v862 = vpop.f32.mrb[0].mxu0
      %v863 = vadd.f32 %v610, %v862
      %v864 = vpop.f32.mrb[0].mxu0
      %v865 = vadd.f32 %v614, %v864
      %v866 = vpop.f32.mrb[0].mxu0
      %v867 = vadd.f32 %v610, %v866
      %v868 = vpop.f32.mrb[0].mxu0
      %v869 = vadd.f32 %v614, %v868
      %870 = vdwg.mxu0
      %v871 = vmax.f32 %v820, 0.0
      %v872 = vmax.f32 %v822, 0.0
      %v873 = vmax.f32 %v863, 0.0
      %v874 = vmax.f32 %v865, 0.0
      %v875 = vmax.f32 %v824, 0.0
      %v876 = vmax.f32 %v826, 0.0
      %v877 = vmax.f32 %v867, 0.0
      %v878 = vmax.f32 %v869, 0.0
      %v879 = vpack.c.bf16 %v875, %v871
      %v880 = vpack.c.bf16 %v876, %v872
      %v881 = vpack.c.bf16 %v877, %v873
      %v882 = vpack.c.bf16 %v878, %v874
      %v884 = vlaneseq
      %v885 = vshrl.u32 %v884, 7
      %v886 = vsub.s32 0, %v885
      %v887 = vrot.slane %v548, %v886
      %v888 = vlaneseq
      %v889 = vshrl.u32 %v888, 7
      %v890 = vsub.s32 1, %v889
      %v891 = vrot.slane %v548, %v890
      %v892 = vlaneseq
      %v893 = vshrl.u32 %v892, 7
      %v894 = vsub.s32 2, %v893
      %v895 = vrot.slane %v548, %v894
      %v999 = vunpack.c.l.b16 %v448
      %v1000 = vunpack.c.h.b16 %v448
      %v1001 = vunpack.c.l.b16 %v449
      %v1002 = vunpack.c.l.b16 %v450
      %v1003 = vunpack.c.h.b16 %v450
      %v1004 = vunpack.c.l.b16 %v451
      %v1005 = vunpack.c.l.b16 %v452
      %v1006 = vunpack.c.h.b16 %v452
      %v1007 = vunpack.c.l.b16 %v453
      %v1008 = vunpack.c.l.b16 %v454
      %v1009 = vunpack.c.h.b16 %v454
      %v1010 = vunpack.c.l.b16 %v455
      %v1011 = vunpack.c.l.b16 %v456
      %v1012 = vunpack.c.h.b16 %v456
      %v1013 = vunpack.c.l.b16 %v457
      %v1014 = vunpack.c.l.b16 %v458
      %v1015 = vunpack.c.h.b16 %v458
      %v1016 = vunpack.c.l.b16 %v459
      %v1017 = vunpack.c.l.b16 %v460
      %v1018 = vunpack.c.h.b16 %v460
      %v1019 = vunpack.c.l.b16 %v461
      %v1020 = vunpack.c.l.b16 %v462
      %v1021 = vunpack.c.h.b16 %v462
      %v1022 = vunpack.c.l.b16 %v463
      %v1023 = vunpack.c.l.b16 %v464
      %v1024 = vunpack.c.h.b16 %v464
      %v1025 = vunpack.c.l.b16 %v465
      %v1026 = vunpack.c.l.b16 %v466
      %v1027 = vunpack.c.h.b16 %v466
      %v1028 = vunpack.c.l.b16 %v467
      %v1029 = vunpack.c.l.b16 %v468
      %v1030 = vunpack.c.h.b16 %v468
      %v1031 = vunpack.c.l.b16 %v469
      %v1032 = vunpack.c.l.b16 %v470
      %v1033 = vunpack.c.h.b16 %v470
      %v1034 = vunpack.c.l.b16 %v471
      %v1035 = vunpack.c.l.b16 %v472
      %v1036 = vunpack.c.h.b16 %v472
      %v1037 = vunpack.c.l.b16 %v473
      %v1038 = vunpack.c.l.b16 %v474
      %v1039 = vunpack.c.h.b16 %v474
      %v1040 = vunpack.c.l.b16 %v475
      %v1041 = vunpack.c.l.b16 %v476
      %v1042 = vunpack.c.h.b16 %v476
      %v1043 = vunpack.c.l.b16 %v477
      %v1044 = vunpack.c.l.b16 %v478
      %v1045 = vunpack.c.h.b16 %v478
      %v1046 = vunpack.c.l.b16 %v479
      %v1047 = vunpack.c.l.b16 %v480
      %v1048 = vunpack.c.h.b16 %v480
      %v1049 = vunpack.c.l.b16 %v481
      %v1050 = vunpack.c.l.b16 %v482
      %v1051 = vunpack.c.h.b16 %v482
      %v1052 = vunpack.c.l.b16 %v483
      %v1053 = vunpack.c.l.b16 %v484
      %v1054 = vunpack.c.h.b16 %v484
      %v1055 = vunpack.c.l.b16 %v485
      %v1056 = vunpack.c.l.b16 %v486
      %v1057 = vunpack.c.h.b16 %v486
      %v1058 = vunpack.c.l.b16 %v487
      %v1059 = vunpack.c.l.b16 %v488
      %v1060 = vunpack.c.h.b16 %v488
      %v1061 = vunpack.c.l.b16 %v489
      %v1062 = vunpack.c.l.b16 %v490
      %v1063 = vunpack.c.h.b16 %v490
      %v1064 = vunpack.c.l.b16 %v491
      %v1065 = vunpack.c.l.b16 %v492
      %v1066 = vunpack.c.h.b16 %v492
      %v1067 = vunpack.c.l.b16 %v493
      %v1068 = vunpack.c.l.b16 %v494
      %v1069 = vunpack.c.h.b16 %v494
      %v1070 = vunpack.c.l.b16 %v495
      %v1071 = vunpack.c.l.b16 %v496
      %v1072 = vunpack.c.h.b16 %v496
      %v1073 = vunpack.c.l.b16 %v497
      %v1074 = vunpack.c.l.b16 %v498
      %v1075 = vunpack.c.h.b16 %v498
      %v1076 = vunpack.c.l.b16 %v499
      %v1077 = vunpack.c.l.b16 %v500
      %v1078 = vunpack.c.h.b16 %v500
      %v1079 = vunpack.c.l.b16 %v501
      %v1080 = vunpack.c.l.b16 %v502
      %v1081 = vunpack.c.h.b16 %v502
      %v1082 = vunpack.c.l.b16 %v503
      %v1083 = vunpack.c.l.b16 %v504
      %v1084 = vunpack.c.h.b16 %v504
      %v1085 = vunpack.c.l.b16 %v505
      %v1086 = vunpack.c.l.b16 %v506
      %v1087 = vunpack.c.h.b16 %v506
      %v1088 = vunpack.c.l.b16 %v507
      %v1089 = vunpack.c.l.b16 %v508
      %v1090 = vunpack.c.h.b16 %v508
      %v1091 = vunpack.c.l.b16 %v509
      %v1092 = vunpack.c.l.b16 %v510
      %v1093 = vunpack.c.h.b16 %v510
      %v1094 = vunpack.c.l.b16 %v511
      %v1095 = vunpack.c.l.b16 %v512
      %v1096 = vunpack.c.h.b16 %v512
      %v1097 = vunpack.c.l.b16 %v513
      %v1098 = vunpack.c.l.b16 %v514
      %v1099 = vunpack.c.h.b16 %v514
      %v1100 = vunpack.c.l.b16 %v515
      %v1101 = vunpack.c.l.b16 %v516
      %v1102 = vunpack.c.h.b16 %v516
      %v1103 = vunpack.c.l.b16 %v517
      %v1104 = vunpack.c.l.b16 %v518
      %v1105 = vunpack.c.h.b16 %v518
      %v1106 = vunpack.c.l.b16 %v519
      %v1107 = vunpack.c.l.b16 %v520
      %v1108 = vunpack.c.h.b16 %v520
      %v1109 = vunpack.c.l.b16 %v521
      %v1110 = vunpack.c.l.b16 %v522
      %v1111 = vunpack.c.h.b16 %v522
      %v1112 = vunpack.c.l.b16 %v523
      %v1113 = vunpack.c.l.b16 %v524
      %v1114 = vunpack.c.h.b16 %v524
      %v1115 = vunpack.c.l.b16 %v525
      %v1116 = vunpack.c.l.b16 %v526
      %v1117 = vunpack.c.h.b16 %v526
      %v1118 = vunpack.c.l.b16 %v527
      %v1119 = vunpack.c.l.b16 %v528
      %v1120 = vunpack.c.h.b16 %v528
      %v1121 = vunpack.c.l.b16 %v529
      %v1122 = vunpack.c.l.b16 %v530
      %v1123 = vunpack.c.h.b16 %v530
      %v1124 = vunpack.c.l.b16 %v531
      %v1125 = vunpack.c.l.b16 %v532
      %v1126 = vunpack.c.h.b16 %v532
      %v1127 = vunpack.c.l.b16 %v533
      %v1128 = vunpack.c.l.b16 %v534
      %v1129 = vunpack.c.h.b16 %v534
      %v1130 = vunpack.c.l.b16 %v535
      %v1131 = vunpack.c.l.b16 %v536
      %v1132 = vunpack.c.h.b16 %v536
      %v1133 = vunpack.c.l.b16 %v537
      %v1134 = vunpack.c.l.b16 %v538
      %v1135 = vunpack.c.h.b16 %v538
      %v1136 = vunpack.c.l.b16 %v539
      %v1137 = vunpack.c.l.b16 %v540
      %v1138 = vunpack.c.h.b16 %v540
      %v1139 = vunpack.c.l.b16 %v541
      %v1140 = vunpack.c.l.b16 %v542
      %v1141 = vunpack.c.h.b16 %v542
      %v1142 = vunpack.c.l.b16 %v543
      %v1143 = vunpack.c.l.b16 %v544
      %v1144 = vunpack.c.h.b16 %v544
      %v1145 = vunpack.c.l.b16 %v545
      %v1146 = vunpack.c.l.b16 %v546
      %v1147 = vunpack.c.h.b16 %v546
      %v1148 = vunpack.c.l.b16 %v547
      %v1149 = vpack.c.b16 %v1002, %v999
      %v1150 = vpack.c.b16 %v1003, %v1000
      %v1151 = vpack.c.b16 %v1004, %v1001
      %v1152 = vpack.c.b16 %v1008, %v1005
      %v1153 = vpack.c.b16 %v1009, %v1006
      %v1154 = vpack.c.b16 %v1010, %v1007
      %v1155 = vpack.c.b16 %v1014, %v1011
      %v1156 = vpack.c.b16 %v1015, %v1012
      %v1157 = vpack.c.b16 %v1016, %v1013
      %v1158 = vpack.c.b16 %v1020, %v1017
      %v1159 = vpack.c.b16 %v1021, %v1018
      %v1160 = vpack.c.b16 %v1022, %v1019
      %v1161 = vpack.c.b16 %v1026, %v1023
      %v1162 = vpack.c.b16 %v1027, %v1024
      %v1163 = vpack.c.b16 %v1028, %v1025
      %v1164 = vpack.c.b16 %v1032, %v1029
      %v1165 = vpack.c.b16 %v1033, %v1030
      %v1166 = vpack.c.b16 %v1034, %v1031
      %v1167 = vpack.c.b16 %v1038, %v1035
      %v1168 = vpack.c.b16 %v1039, %v1036
      %v1169 = vpack.c.b16 %v1040, %v1037
      %v1170 = vpack.c.b16 %v1044, %v1041
      %v1171 = vpack.c.b16 %v1045, %v1042
      %v1172 = vpack.c.b16 %v1046, %v1043
      %v1173 = vpack.c.b16 %v1050, %v1047
      %v1174 = vpack.c.b16 %v1051, %v1048
      %v1175 = vpack.c.b16 %v1052, %v1049
      %v1176 = vpack.c.b16 %v1056, %v1053
      %v1177 = vpack.c.b16 %v1057, %v1054
      %v1178 = vpack.c.b16 %v1058, %v1055
      %v1179 = vpack.c.b16 %v1062, %v1059
      %v1180 = vpack.c.b16 %v1063, %v1060
      %v1181 = vpack.c.b16 %v1064, %v1061
      %v1182 = vpack.c.b16 %v1068, %v1065
      %v1183 = vpack.c.b16 %v1069, %v1066
      %v1184 = vpack.c.b16 %v1070, %v1067
      %v1185 = vpack.c.b16 %v1074, %v1071
      %v1186 = vpack.c.b16 %v1075, %v1072
      %v1187 = vpack.c.b16 %v1076, %v1073
      %v1188 = vpack.c.b16 %v1080, %v1077
      %v1189 = vpack.c.b16 %v1081, %v1078
      %v1190 = vpack.c.b16 %v1082, %v1079
      %v1191 = vpack.c.b16 %v1086, %v1083
      %v1192 = vpack.c.b16 %v1087, %v1084
      %v1193 = vpack.c.b16 %v1088, %v1085
      %v1194 = vpack.c.b16 %v1092, %v1089
      %v1195 = vpack.c.b16 %v1093, %v1090
      %v1196 = vpack.c.b16 %v1094, %v1091
      %v1197 = vpack.c.b16 %v1098, %v1095
      %v1198 = vpack.c.b16 %v1099, %v1096
      %v1199 = vpack.c.b16 %v1100, %v1097
      %v1200 = vpack.c.b16 %v1104, %v1101
      %v1201 = vpack.c.b16 %v1105, %v1102
      %v1202 = vpack.c.b16 %v1106, %v1103
      %v1203 = vpack.c.b16 %v1110, %v1107
      %v1204 = vpack.c.b16 %v1111, %v1108
      %v1205 = vpack.c.b16 %v1112, %v1109
      %v1206 = vpack.c.b16 %v1116, %v1113
      %v1207 = vpack.c.b16 %v1117, %v1114
      %v1208 = vpack.c.b16 %v1118, %v1115
      %v1209 = vpack.c.b16 %v1122, %v1119
      %v1210 = vpack.c.b16 %v1123, %v1120
      %v1211 = vpack.c.b16 %v1124, %v1121
      %v1212 = vpack.c.b16 %v1128, %v1125
      %v1213 = vpack.c.b16 %v1129, %v1126
      %v1214 = vpack.c.b16 %v1130, %v1127
      %v1215 = vpack.c.b16 %v1134, %v1131
      %v1216 = vpack.c.b16 %v1135, %v1132
      %v1217 = vpack.c.b16 %v1136, %v1133
      %v1218 = vpack.c.b16 %v1140, %v1137
      %v1219 = vpack.c.b16 %v1141, %v1138
      %v1220 = vpack.c.b16 %v1142, %v1139
      %v1221 = vpack.c.b16 %v1146, %v1143
      %v1222 = vpack.c.b16 %v1147, %v1144
      %v1223 = vpack.c.b16 %v1148, %v1145
      %vm1299 = vcmask 130048
      %v1301 = vsel %vm1299, %v882, 0
      %1303 = vmatprep.subr.bf16.mxu0 %v1150
      %1304 = vmatpush1.bf16.msra.mxu0 %v1149
      %1305 = vmatprep.subr.bf16.mxu0 %v1153
      %1306 = vmatpush1.bf16.msra.mxu0 %v1152
      %1307 = vmatprep.subr.bf16.mxu0 %v1156
      %1308 = vmatpush1.bf16.msra.mxu0 %v1155
      %1309 = vmatprep.subr.bf16.mxu0 %v1159
      %1310 = vmatpush1.bf16.msra.mxu0 %v1158
      %1311 = vmatprep.subr.bf16.mxu0 %v1162
      %1312 = vmatpush1.bf16.msra.mxu0 %v1161
      %1313 = vmatprep.subr.bf16.mxu0 %v1165
      %1314 = vmatpush1.bf16.msra.mxu0 %v1164
      %1315 = vmatprep.subr.bf16.mxu0 %v1168
      %1316 = vmatpush1.bf16.msra.mxu0 %v1167
      %1317 = vmatprep.subr.bf16.mxu0 %v1171
      %1318 = vmatpush1.bf16.msra.mxu0 %v1170
      %1319 = vmatprep.subr.bf16.mxu0 %v1174
      %1320 = vmatpush1.bf16.msra.mxu0 %v1173
      %1321 = vmatprep.subr.bf16.mxu0 %v1177
      %1322 = vmatpush1.bf16.msra.mxu0 %v1176
      %1323 = vmatprep.subr.bf16.mxu0 %v1180
      %1324 = vmatpush1.bf16.msra.mxu0 %v1179
      %1325 = vmatprep.subr.bf16.mxu0 %v1183
      %1326 = vmatpush1.bf16.msra.mxu0 %v1182
      %1327 = vmatprep.subr.bf16.mxu0 %v1186
      %1328 = vmatpush1.bf16.msra.mxu0 %v1185
      %1329 = vmatprep.subr.bf16.mxu0 %v1189
      %1330 = vmatpush1.bf16.msra.mxu0 %v1188
      %1331 = vmatprep.subr.bf16.mxu0 %v1192
      %1332 = vmatpush1.bf16.msra.mxu0 %v1191
      %1333 = vmatprep.subr.bf16.mxu0 %v1195
      %1334 = vmatpush1.bf16.msra.mxu0 %v1194
      %1335 = vmatprep.mubr.bf16.mxu0 %v880
      %1336 = vmatmul.mubr.bf16.gmra.mrb[0].mxu0 %v879
      %v1337 = vpop.f32.mrb[0].mxu0
      %v1338 = vadd.f32 %v887, %v1337
      %v1339 = vpop.f32.mrb[0].mxu0
      %v1340 = vadd.f32 %v891, %v1339
      %v1341 = vpop.f32.mrb[0].mxu0
      %v1342 = vadd.f32 %v887, %v1341
      %v1343 = vpop.f32.mrb[0].mxu0
      %v1344 = vadd.f32 %v891, %v1343
      %1345 = vdwg.mxu0
      %1346 = vmatprep.subr.bf16.mxu0 %v1198
      %1347 = vmatpush1.bf16.msra.mxu0 %v1197
      %1348 = vmatprep.subr.bf16.mxu0 %v1201
      %1349 = vmatpush1.bf16.msra.mxu0 %v1200
      %1350 = vmatprep.subr.bf16.mxu0 %v1204
      %1351 = vmatpush1.bf16.msra.mxu0 %v1203
      %1352 = vmatprep.subr.bf16.mxu0 %v1207
      %1353 = vmatpush1.bf16.msra.mxu0 %v1206
      %1354 = vmatprep.subr.bf16.mxu0 %v1210
      %1355 = vmatpush1.bf16.msra.mxu0 %v1209
      %1356 = vmatprep.subr.bf16.mxu0 %v1213
      %1357 = vmatpush1.bf16.msra.mxu0 %v1212
      %1358 = vmatprep.subr.bf16.mxu0 %v1216
      %1359 = vmatpush1.bf16.msra.mxu0 %v1215
      %1360 = vmatprep.subr.bf16.mxu0 %v1219
      %1361 = vmatpush1.bf16.msra.mxu0 %v1218
      %1362 = vmatprep.subr.bf16.mxu0 %v1222
      %1363 = vmatpush1.bf16.msra.mxu0 %v1221
      %1364 = vmatprep.subr.bf16.mxu0 0
      %1365 = vmatpush1.bf16.msra.mxu0 0
      %1366 = vmatprep.subr.bf16.mxu0 0
      %1367 = vmatpush1.bf16.msra.mxu0 0
      %1368 = vmatprep.subr.bf16.mxu0 0
      %1369 = vmatpush1.bf16.msra.mxu0 0
      %1370 = vmatprep.subr.bf16.mxu0 0
      %1371 = vmatpush1.bf16.msra.mxu0 0
      %1372 = vmatprep.subr.bf16.mxu0 0
      %1373 = vmatpush1.bf16.msra.mxu0 0
      %1374 = vmatprep.subr.bf16.mxu0 0
      %1375 = vmatpush1.bf16.msra.mxu0 0
      %1376 = vmatprep.subr.bf16.mxu0 0
      %1377 = vmatpush1.bf16.msra.mxu0 0
      %1378 = vmatprep.mubr.bf16.mxu0 %v1301
      %1379 = vmatmul.mubr.bf16.gmra.mrb[0].mxu0 %v881
      %v1380 = vpop.f32.mrb[0].mxu0
      %v1381 = vadd.f32 %v1338, %v1380
      %v1382 = vpop.f32.mrb[0].mxu0
      %v1383 = vadd.f32 %v1340, %v1382
      %v1384 = vpop.f32.mrb[0].mxu0
      %v1385 = vadd.f32 %v1342, %v1384
      %v1386 = vpop.f32.mrb[0].mxu0
      %v1387 = vadd.f32 %v1344, %v1386
      %1388 = vdwg.mxu0
      %1389 = vmatprep.subr.bf16.mxu0 0
      %1390 = vmatpush1.bf16.msra.mxu0 %v1151
      %1391 = vmatprep.subr.bf16.mxu0 0
      %1392 = vmatpush1.bf16.msra.mxu0 %v1154
      %1393 = vmatprep.subr.bf16.mxu0 0
      %1394 = vmatpush1.bf16.msra.mxu0 %v1157
      %1395 = vmatprep.subr.bf16.mxu0 0
      %1396 = vmatpush1.bf16.msra.mxu0 %v1160
      %1397 = vmatprep.subr.bf16.mxu0 0
      %1398 = vmatpush1.bf16.msra.mxu0 %v1163
      %1399 = vmatprep.subr.bf16.mxu0 0
      %1400 = vmatpush1.bf16.msra.mxu0 %v1166
      %1401 = vmatprep.subr.bf16.mxu0 0
      %1402 = vmatpush1.bf16.msra.mxu0 %v1169
      %1403 = vmatprep.subr.bf16.mxu0 0
      %1404 = vmatpush1.bf16.msra.mxu0 %v1172
      %1405 = vmatprep.subr.bf16.mxu0 0
      %1406 = vmatpush1.bf16.msra.mxu0 %v1175
      %1407 = vmatprep.subr.bf16.mxu0 0
      %1408 = vmatpush1.bf16.msra.mxu0 %v1178
      %1409 = vmatprep.subr.bf16.mxu0 0
      %1410 = vmatpush1.bf16.msra.mxu0 %v1181
      %1411 = vmatprep.subr.bf16.mxu0 0
      %1412 = vmatpush1.bf16.msra.mxu0 %v1184
      %1413 = vmatprep.subr.bf16.mxu0 0
      %1414 = vmatpush1.bf16.msra.mxu0 %v1187
      %1415 = vmatprep.subr.bf16.mxu0 0
      %1416 = vmatpush1.bf16.msra.mxu0 %v1190
      %1417 = vmatprep.subr.bf16.mxu0 0
      %1418 = vmatpush1.bf16.msra.mxu0 %v1193
      %1419 = vmatprep.subr.bf16.mxu0 0
      %1420 = vmatpush1.bf16.msra.mxu0 %v1196
      %1421 = vmatprep.mubr.bf16.mxu0 %v880
      %1422 = vmatmul.mubr.bf16.gmra.mrb[0].mxu0 %v879
      %v1423 = vpop.f32.mrb[0].mxu0
      %v1424 = vadd.f32 %v895, %v1423
      %v1425 = vpop.f32.mrb[0].mxu0
      %v1426 = vpop.f32.mrb[0].mxu0
      %v1427 = vadd.f32 %v895, %v1426
      %v1428 = vpop.f32.mrb[0].mxu0
      %1429 = vdwg.mxu0
      %1430 = vmatprep.subr.bf16.mxu0 0
      %1431 = vmatpush1.bf16.msra.mxu0 %v1199
      %1432 = vmatprep.subr.bf16.mxu0 0
      %1433 = vmatpush1.bf16.msra.mxu0 %v1202
      %1434 = vmatprep.subr.bf16.mxu0 0
      %1435 = vmatpush1.bf16.msra.mxu0 %v1205
      %1436 = vmatprep.subr.bf16.mxu0 0
      %1437 = vmatpush1.bf16.msra.mxu0 %v1208
      %1438 = vmatprep.subr.bf16.mxu0 0
      %1439 = vmatpush1.bf16.msra.mxu0 %v1211
      %1440 = vmatprep.subr.bf16.mxu0 0
      %1441 = vmatpush1.bf16.msra.mxu0 %v1214
      %1442 = vmatprep.subr.bf16.mxu0 0
      %1443 = vmatpush1.bf16.msra.mxu0 %v1217
      %1444 = vmatprep.subr.bf16.mxu0 0
      %1445 = vmatpush1.bf16.msra.mxu0 %v1220
      %1446 = vmatprep.subr.bf16.mxu0 0
      %1447 = vmatpush1.bf16.msra.mxu0 %v1223
      %1448 = vmatprep.subr.bf16.mxu0 0
      %1449 = vmatpush1.bf16.msra.mxu0 0
      %1450 = vmatprep.subr.bf16.mxu0 0
      %1451 = vmatpush1.bf16.msra.mxu0 0
      %1452 = vmatprep.subr.bf16.mxu0 0
      %1453 = vmatpush1.bf16.msra.mxu0 0
      %1454 = vmatprep.subr.bf16.mxu0 0
      %1455 = vmatpush1.bf16.msra.mxu0 0
      %1456 = vmatprep.subr.bf16.mxu0 0
      %1457 = vmatpush1.bf16.msra.mxu0 0
      %1458 = vmatprep.subr.bf16.mxu0 0
      %1459 = vmatpush1.bf16.msra.mxu0 0
      %1460 = vmatprep.subr.bf16.mxu0 0
      %1461 = vmatpush1.bf16.msra.mxu0 0
      %1462 = vmatprep.mubr.bf16.mxu0 %v1301
      %1463 = vmatmul.mubr.bf16.gmra.mrb[0].mxu0 %v881
      %v1464 = vpop.f32.mrb[0].mxu0
      %v1465 = vadd.f32 %v1424, %v1464
      %v1466 = vpop.f32.mrb[0].mxu0
      %v1467 = vpop.f32.mrb[0].mxu0
      %v1468 = vadd.f32 %v1427, %v1467
      %v1469 = vpop.f32.mrb[0].mxu0
      %1470 = vdwg.mxu0
      %v1471 = vmax.f32 %v1381, 0.0
      %v1472 = vmax.f32 %v1383, 0.0
      %v1473 = vmax.f32 %v1465, 0.0
      %v1474 = vmax.f32 %v1385, 0.0
      %v1475 = vmax.f32 %v1387, 0.0
      %v1476 = vmax.f32 %v1468, 0.0
      %v1477 = vpack.c.bf16 %v1474, %v1471
      %v1478 = vpack.c.bf16 %v1475, %v1472
      %v1479 = vpack.c.bf16 %v1476, %v1473
      %v1481 = vlaneseq
      %v1482 = vshrl.u32 %v1481, 7
      %v1483 = vsub.s32 0, %v1482
      %v1484 = vrot.slane %v597, %v1483
      %v1534 = vunpack.c.l.b16 %v549
      %v1535 = vunpack.c.l.b16 %v550
      %v1536 = vunpack.c.l.b16 %v551
      %v1537 = vunpack.c.l.b16 %v552
      %v1538 = vunpack.c.l.b16 %v553
      %v1539 = vunpack.c.l.b16 %v554
      %v1540 = vunpack.c.l.b16 %v555
      %v1541 = vunpack.c.l.b16 %v556
      %v1542 = vunpack.c.l.b16 %v557
      %v1543 = vunpack.c.l.b16 %v558
      %v1544 = vunpack.c.l.b16 %v559
      %v1545 = vunpack.c.l.b16 %v560
      %v1546 = vunpack.c.l.b16 %v561
      %v1547 = vunpack.c.l.b16 %v562
      %v1548 = vunpack.c.l.b16 %v563
      %v1549 = vunpack.c.l.b16 %v564
      %v1550 = vunpack.c.l.b16 %v565
      %v1551 = vunpack.c.l.b16 %v566
      %v1552 = vunpack.c.l.b16 %v567
      %v1553 = vunpack.c.l.b16 %v568
      %v1554 = vunpack.c.l.b16 %v569
      %v1555 = vunpack.c.l.b16 %v570
      %v1556 = vunpack.c.l.b16 %v571
      %v1557 = vunpack.c.l.b16 %v572
      %v1558 = vunpack.c.l.b16 %v573
      %v1559 = vunpack.c.l.b16 %v574
      %v1560 = vunpack.c.l.b16 %v575
      %v1561 = vunpack.c.l.b16 %v576
      %v1562 = vunpack.c.l.b16 %v577
      %v1563 = vunpack.c.l.b16 %v578
      %v1564 = vunpack.c.l.b16 %v579
      %v1565 = vunpack.c.l.b16 %v580
      %v1566 = vunpack.c.l.b16 %v581
      %v1567 = vunpack.c.l.b16 %v582
      %v1568 = vunpack.c.l.b16 %v583
      %v1569 = vunpack.c.l.b16 %v584
      %v1570 = vunpack.c.l.b16 %v585
      %v1571 = vunpack.c.l.b16 %v586
      %v1572 = vunpack.c.l.b16 %v587
      %v1573 = vunpack.c.l.b16 %v588
      %v1574 = vunpack.c.l.b16 %v589
      %v1575 = vunpack.c.l.b16 %v590
      %v1576 = vunpack.c.l.b16 %v591
      %v1577 = vunpack.c.l.b16 %v592
      %v1578 = vunpack.c.l.b16 %v593
      %v1579 = vunpack.c.l.b16 %v594
      %v1580 = vunpack.c.l.b16 %v595
      %v1581 = vunpack.c.l.b16 %v596
      %v1582 = vpack.c.b16 %v1535, %v1534
      %v1583 = vpack.c.b16 %v1537, %v1536
      %v1584 = vpack.c.b16 %v1539, %v1538
      %v1585 = vpack.c.b16 %v1541, %v1540
      %v1586 = vpack.c.b16 %v1543, %v1542
      %v1587 = vpack.c.b16 %v1545, %v1544
      %v1588 = vpack.c.b16 %v1547, %v1546
      %v1589 = vpack.c.b16 %v1549, %v1548
      %v1590 = vpack.c.b16 %v1551, %v1550
      %v1591 = vpack.c.b16 %v1553, %v1552
      %v1592 = vpack.c.b16 %v1555, %v1554
      %v1593 = vpack.c.b16 %v1557, %v1556
      %v1594 = vpack.c.b16 %v1559, %v1558
      %v1595 = vpack.c.b16 %v1561, %v1560
      %v1596 = vpack.c.b16 %v1563, %v1562
      %v1597 = vpack.c.b16 %v1565, %v1564
      %v1598 = vpack.c.b16 %v1567, %v1566
      %v1599 = vpack.c.b16 %v1569, %v1568
      %v1600 = vpack.c.b16 %v1571, %v1570
      %v1601 = vpack.c.b16 %v1573, %v1572
      %v1602 = vpack.c.b16 %v1575, %v1574
      %v1603 = vpack.c.b16 %v1577, %v1576
      %v1604 = vpack.c.b16 %v1579, %v1578
      %v1605 = vpack.c.b16 %v1581, %v1580
      %1630 = vmatprep.subr.bf16.mxu0 0
      %1631 = vmatpush1.bf16.msra.mxu0 %v1582
      %1632 = vmatprep.subr.bf16.mxu0 0
      %1633 = vmatpush1.bf16.msra.mxu0 %v1583
      %1634 = vmatprep.subr.bf16.mxu0 0
      %1635 = vmatpush1.bf16.msra.mxu0 %v1584
      %1636 = vmatprep.subr.bf16.mxu0 0
      %1637 = vmatpush1.bf16.msra.mxu0 %v1585
      %1638 = vmatprep.subr.bf16.mxu0 0
      %1639 = vmatpush1.bf16.msra.mxu0 %v1586
      %1640 = vmatprep.subr.bf16.mxu0 0
      %1641 = vmatpush1.bf16.msra.mxu0 %v1587
      %1642 = vmatprep.subr.bf16.mxu0 0
      %1643 = vmatpush1.bf16.msra.mxu0 %v1588
      %1644 = vmatprep.subr.bf16.mxu0 0
      %1645 = vmatpush1.bf16.msra.mxu0 %v1589
      %1646 = vmatprep.subr.bf16.mxu0 0
      %1647 = vmatpush1.bf16.msra.mxu0 %v1590
      %1648 = vmatprep.subr.bf16.mxu0 0
      %1649 = vmatpush1.bf16.msra.mxu0 %v1591
      %1650 = vmatprep.subr.bf16.mxu0 0
      %1651 = vmatpush1.bf16.msra.mxu0 %v1592
      %1652 = vmatprep.subr.bf16.mxu0 0
      %1653 = vmatpush1.bf16.msra.mxu0 %v1593
      %1654 = vmatprep.subr.bf16.mxu0 0
      %1655 = vmatpush1.bf16.msra.mxu0 %v1594
      %1656 = vmatprep.subr.bf16.mxu0 0
      %1657 = vmatpush1.bf16.msra.mxu0 %v1595
      %1658 = vmatprep.subr.bf16.mxu0 0
      %1659 = vmatpush1.bf16.msra.mxu0 %v1596
      %1660 = vmatprep.subr.bf16.mxu0 0
      %1661 = vmatpush1.bf16.msra.mxu0 %v1597
      %1662 = vmatprep.mubr.bf16.mxu0 %v1478
      %1663 = vmatmul.mubr.bf16.gmra.mrb[0].mxu0 %v1477
      %v1664 = vpop.f32.mrb[0].mxu0
      %v1665 = vadd.f32 %v1484, %v1664
      %v1666 = vpop.f32.mrb[0].mxu0
      %v1667 = vpop.f32.mrb[0].mxu0
      %v1668 = vadd.f32 %v1484, %v1667
      %v1669 = vpop.f32.mrb[0].mxu0
      %1670 = vdwg.mxu0
      %1671 = vmatprep.subr.bf16.mxu0 0
      %1672 = vmatpush1.bf16.msra.mxu0 %v1598
      %1673 = vmatprep.subr.bf16.mxu0 0
      %1674 = vmatpush1.bf16.msra.mxu0 %v1599
      %1675 = vmatprep.subr.bf16.mxu0 0
      %1676 = vmatpush1.bf16.msra.mxu0 %v1600
      %1677 = vmatprep.subr.bf16.mxu0 0
      %1678 = vmatpush1.bf16.msra.mxu0 %v1601
      %1679 = vmatprep.subr.bf16.mxu0 0
      %1680 = vmatpush1.bf16.msra.mxu0 %v1602
      %1681 = vmatprep.subr.bf16.mxu0 0
      %1682 = vmatpush1.bf16.msra.mxu0 %v1603
      %1683 = vmatprep.subr.bf16.mxu0 0
      %1684 = vmatpush1.bf16.msra.mxu0 %v1604
      %1685 = vmatprep.subr.bf16.mxu0 0
      %1686 = vmatpush1.bf16.msra.mxu0 %v1605
      %1687 = vmatprep.subr.bf16.mxu0 0
      %1688 = vmatpush1.bf16.msra.mxu0 0
      %1689 = vmatprep.subr.bf16.mxu0 0
      %1690 = vmatpush1.bf16.msra.mxu0 0
      %1691 = vmatprep.subr.bf16.mxu0 0
      %1692 = vmatpush1.bf16.msra.mxu0 0
      %1693 = vmatprep.subr.bf16.mxu0 0
      %1694 = vmatpush1.bf16.msra.mxu0 0
      %1695 = vmatprep.subr.bf16.mxu0 0
      %1696 = vmatpush1.bf16.msra.mxu0 0
      %1697 = vmatprep.subr.bf16.mxu0 0
      %1698 = vmatpush1.bf16.msra.mxu0 0
      %1699 = vmatprep.subr.bf16.mxu0 0
      %1700 = vmatpush1.bf16.msra.mxu0 0
      %1701 = vmatprep.subr.bf16.mxu0 0
      %1702 = vmatpush1.bf16.msra.mxu0 0
      %1703 = vmatprep.mubr.bf16.mxu0 0
      %1704 = vmatmul.mubr.bf16.gmra.mrb[0].mxu0 %v1479
      %v1705 = vpop.f32.mrb[0].mxu0
      %v1706 = vadd.f32 %v1665, %v1705
      %v1707 = vpop.f32.mrb[0].mxu0
      %v1708 = vpop.f32.mrb[0].mxu0
      %v1709 = vadd.f32 %v1668, %v1708
      %v1710 = vpop.f32.mrb[0].mxu0
      %1711 = vdwg.mxu0
      %vm1712 = vcmask 64512
      %1713 = vst.msk [vmem:[%s410] sm:$0xff] %vm1712, %v1706
      %1714 = vst.msk [vmem:[%s410 + $0x8] sm:$0xff] %vm1712, %v1709
      %s1715 = smul.u32 2, %s23
      %p1716 = scmp.lt.s32.totalorder %s22, 1
      %s1717 = scalar_select %p1716, %s22, 1
      %p1718 = scmp.lt.s32.totalorder %s1715, 1
      %s1719 = scalar_select %p1718, %s1715, 1
      %s1720 = smul.addr %s1717, 2
      %s1721 = sadd.s32 %s1719, %s1720
      %s1722 = smul.addr %s1721, 8
      %s1723 = scalar_lea.vmem %s7, %s1722
      // Predicated region
      $region49: #{tpu_custom_call.1} parent=47 // pred_check
        %p1724 = pneg %p232
      $region50: #{tpu_custom_call.1} parent=47 // pred_check_branch
        %1726 = sbr.rel (%p1724) target = $region52
      $region51: #{tpu_custom_call.1} parent=47 // pred_region
        %s1727 = smul.u32 2, %s23
      $region52: #{tpu_custom_call.1} parent=47 // pred_fallthru
        _
    $region48: #{tpu_custom_call.1} parent=5 // pred_fallthru
      _
    %p1728 = scmp.le.s32.totalorder 2, %s13
    // Predicated region
    $region53: #{tpu_custom_call.1} parent=5 // pred_check
      %p1729 = pneg %p1728
    $region54: #{tpu_custom_call.1} parent=5 // pred_check_branch
      %1731 = sbr.rel (%p1729) target = $region56
    $region55: #{tpu_custom_call.1} parent=5 // pred_region
      %s1732 = ssub.s32 %s13, 2
      // Predicated region
      $region57: #{tpu_custom_call.1} parent=55 // pred_check
        %p1733 = pneg %p238
      $region58: #{tpu_custom_call.1} parent=55 // pred_check_branch
        %1735 = sbr.rel (%p1733) target = $region60
      $region59: #{tpu_custom_call.1} parent=55 // pred_region
        %s1736 = smul.u32 2, %s25
        %p1737 = scmp.lt.s32.totalorder %s24, 1
        %s1738 = scalar_select %p1737, %s24, 1
        %p1739 = scmp.lt.s32.totalorder %s1736, 1
        %s1740 = scalar_select %p1739, %s1736, 1
        %s1741 = smul.addr %s1738, 2
        %s1742 = sadd.s32 %s1740, %s1741
        %s1743 = smul.addr %s1742, 8
        %s1744 = scalar_lea.vmem %s7, %s1743
      $region60: #{tpu_custom_call.1} parent=55 // pred_fallthru
        _
    $region56: #{tpu_custom_call.1} parent=5 // pred_fallthru
      _
  $region6: #{tpu_custom_call.1} parent=0 // loop_footer
    %s17 = sadd.s32 1, %s13
  $region7: #{tpu_custom_call.1} parent=0 // loop_footer_branch
    %12 = sbr.rel target = $region3
  $region8: #{tpu_custom_call.1} parent=0 // loop_exit
    _

</llo_original>
